<compile_context>
chip_gen: v7x
topology: tpu7x:2x2x1
jax: 0.10.0
libtpu: 0.0.40
codegen_flags: <defaults>
</compile_context>

<pallas_src>
import math
import jax
import jax.numpy as jnp
from jax import lax
from jax.experimental import pallas as pl
from jax.experimental.pallas import tpu as pltpu


def gru_recurrence_kernel(gi_ref, whh_ref, bhn_ref, wfc_ref, bfc_ref, out_ref, h_scr):
    # gi_ref : (TILE_T, B_pad, 3H)  hoisted input projection (+ folded biases), time-major
    # whh_ref: (H, 3H)              hidden weights, pre-transposed for h @ W
    # bhn_ref: (1, H)               b_hn (only bias left inside the recurrence)
    # wfc_ref: (H, 2), bfc_ref: (1, 2)
    # h_scr  : (B_pad, H)           hidden state, persists across grid (time) steps
    t_idx = pl.program_id(0)
    n_t = pl.num_programs(0)

    @pl.when(t_idx == 0)
    def _():
        h_scr[...] = jnp.zeros_like(h_scr)

    whh = whh_ref[...]
    bhn = bhn_ref[...]
    H = whh.shape[0]
    tile_t = gi_ref.shape[0]

    def step(tt, h):
        gi = gi_ref[tt]                                                    # (B_pad, 3H)
        gh = jnp.dot(h, whh, preferred_element_type=jnp.float32)           # (B_pad, 3H)
        r = jax.nn.sigmoid(gi[:, 0:H] + gh[:, 0:H])
        z = jax.nn.sigmoid(gi[:, H:2 * H] + gh[:, H:2 * H])
        n = jnp.tanh(gi[:, 2 * H:3 * H] + r * (gh[:, 2 * H:3 * H] + bhn))
        return n + z * (h - n)                                             # == (1-z)*n + z*h

    # Short static trip count: fully unroll so the scheduler can overlap MXU/EUP/VPU work.
    h = lax.fori_loop(0, tile_t, step, h_scr[...], unroll=True)
    h_scr[...] = h

    @pl.when(t_idx == n_t - 1)
    def _():
        out_ref[...] = (jnp.dot(h, wfc_ref[...], preferred_element_type=jnp.float32)
                        + bfc_ref[...])


def _pick_tile_t(T, cap=8):
    """Largest divisor of T that is <= cap (keeps the time grid exact, no padding)."""
    for t in range(min(cap, T), 0, -1):
        if T % t == 0:
            return t
    return 1


def gru_classifier_forward(x, params, tile_t_cap=8):
    """x: (B, T, I) float32 -> logits (B, 2) float32."""
    w_ih_t, w_hh_t, b_ih, b_hh, w_fc_t, b_fc = params
    B, T, I = x.shape
    H = w_hh_t.shape[0]

    # Pad batch to the 8-sublane minimum so loads/stores and MXU rows are unmasked.
    B_pad = ((B + 7) // 8) * 8
    if B_pad != B:
        x = jnp.pad(x, ((0, B_pad - B), (0, 0), (0, 0)))

    # Fold b_ih fully and the r/z parts of b_hh into the hoisted input projection.
    b_fold = b_ih.at[:, :2 * H].add(b_hh[:, :2 * H])        # (1, 3H)
    b_hn = b_hh[:, 2 * H:]                                   # (1, H)

    # Hoisted input projection: one large, well-utilized matmul, time-major output.
    gi_all = jnp.einsum('bti,ig->tbg', x, w_ih_t,
                        preferred_element_type=jnp.float32) + b_fold       # (T, B_pad, 3H)

    tile_t = _pick_tile_t(T, tile_t_cap)
    grid = (T // tile_t,)

    out = pl.pallas_call(
        gru_recurrence_kernel,
        out_shape=jax.ShapeDtypeStruct((B_pad, 2), jnp.float32),
        grid_spec=pltpu.PrefetchScalarGridSpec(
            num_scalar_prefetch=0,
            grid=grid,
            in_specs=[
                pl.BlockSpec((tile_t, B_pad, 3 * H), lambda t: (t, 0, 0)),  # streamed gi
                pl.BlockSpec((H, 3 * H), lambda t: (0, 0)),                 # W_hh^T (resident)
                pl.BlockSpec((1, H), lambda t: (0, 0)),                     # b_hn
                pl.BlockSpec((H, 2), lambda t: (0, 0)),                     # W_fc^T
                pl.BlockSpec((1, 2), lambda t: (0, 0)),                     # b_fc
            ],
            out_specs=pl.BlockSpec((B_pad, 2), lambda t: (0, 0)),
            scratch_shapes=[pltpu.VMEM((B_pad, H), jnp.float32)],           # hidden state
        ),
        compiler_params=pltpu.CompilerParams(
            # Time axis is a sequential recurrence: must be "arbitrary", never "parallel".
            dimension_semantics=("arbitrary",),
            vmem_limit_bytes=32 * 1024 * 1024,   # safe on v5e/v6e/v7x; usage here is tiny
        ),
    )(gi_all, w_hh_t, b_hn, w_fc_t, b_fc)

    return out[:B]


def init_params(key, input_size, hidden_dim):
    """Deterministic PyTorch-style uniform(-1/sqrt(H), 1/sqrt(H)) init."""
    k = 1.0 / math.sqrt(hidden_dim)
    keys = jax.random.split(key, 6)
    w_ih = jax.random.uniform(keys[0], (3 * hidden_dim, input_size), jnp.float32, -k, k)
    w_hh = jax.random.uniform(keys[1], (3 * hidden_dim, hidden_dim), jnp.float32, -k, k)
    b_ih = jax.random.uniform(keys[2], (3 * hidden_dim,), jnp.float32, -k, k)
    b_hh = jax.random.uniform(keys[3], (3 * hidden_dim,), jnp.float32, -k, k)
    w_fc = jax.random.uniform(keys[4], (2, hidden_dim), jnp.float32, -k, k)
    b_fc = jax.random.uniform(keys[5], (2,), jnp.float32, -k, k)
    # Pre-transpose for "act @ weight" matmuls; biases as (1, N) rows.
    return (w_ih.T, w_hh.T, b_ih[None, :], b_hh[None, :], w_fc.T, b_fc[None, :])


def reference_forward(x, params):
    """Pure-JAX reference (original, un-folded formulation) used for a sanity check."""
    w_ih_t, w_hh_t, b_ih, b_hh, w_fc_t, b_fc = params
    H = w_hh_t.shape[0]
    B = x.shape[0]

    def step(h, x_t):
        gi = x_t @ w_ih_t + b_ih
        gh = h @ w_hh_t + b_hh
        r = jax.nn.sigmoid(gi[:, :H] + gh[:, :H])
        z = jax.nn.sigmoid(gi[:, H:2 * H] + gh[:, H:2 * H])
        n = jnp.tanh(gi[:, 2 * H:] + r * gh[:, 2 * H:])
        h_new = (1.0 - z) * n + z * h
        return h_new, None

    h0 = jnp.zeros((B, H), jnp.float32)
    h, _ = lax.scan(step, h0, jnp.transpose(x, (1, 0, 2)))
    return h @ w_fc_t + b_fc


if __name__ == "__main__":
    # Small shapes consistent with the module: input_size=2, batch=4, seq=16, hidden=32.
    input_size, hidden_dim = 2, 32
    B, T = 4, 16

    key = jax.random.PRNGKey(0)
    k_x, k_p = jax.random.split(key)
    x = jax.random.normal(k_x, (B, T, input_size), jnp.float32)
    params = init_params(k_p, input_size, hidden_dim)

    out = gru_classifier_forward(x, params)
    out = jax.block_until_ready(out)

    ref = reference_forward(x, params)
    assert out.shape == (B, 2)
    assert jnp.allclose(out, ref, atol=1e-5, rtol=1e-5), "mismatch vs reference"

    print("KERNEL_OK")
</pallas_src>

<mosaic_0001>
module attributes {stable_mosaic.version = 11 : i64} {
  func.func @gru_recurrence_kernel(%arg0: i32, %arg1: memref<8x8x96xf32, #tpu.memory_space<vmem>>, %arg2: memref<32x96xf32, #tpu.memory_space<vmem>>, %arg3: memref<1x32xf32, #tpu.memory_space<vmem>>, %arg4: memref<32x2xf32, #tpu.memory_space<vmem>>, %arg5: memref<1x2xf32, #tpu.memory_space<vmem>>, %arg6: memref<8x2xf32, #tpu.memory_space<vmem>>, %arg7: memref<8x32xf32, #tpu.memory_space<vmem>>) attributes {dimension_semantics = [#tpu.dimension_semantics<arbitrary>], iteration_bounds = array<i64: 2>, scalar_prefetch = 0 : i64, scratch_operands = 1 : i64, tpu.core_type = #tpu.core_type<tc>, window_params = [{transform_indices = @transform_0, window_bounds = array<i64: 8, 8, 96>}, {pipeline_mode = #tpu.pipeline_mode<synchronous>, transform_indices = @transform_1, window_bounds = array<i64: 32, 96>}, {pipeline_mode = #tpu.pipeline_mode<synchronous>, transform_indices = @transform_2, window_bounds = array<i64: 1, 32>}, {pipeline_mode = #tpu.pipeline_mode<synchronous>, transform_indices = @transform_3, window_bounds = array<i64: 32, 2>}, {pipeline_mode = #tpu.pipeline_mode<synchronous>, transform_indices = @transform_4, window_bounds = array<i64: 1, 2>}, {pipeline_mode = #tpu.pipeline_mode<synchronous>, transform_indices = @transform_5, window_bounds = array<i64: 8, 2>}]} {
    %c0_i32 = arith.constant 0 : i32
    %0 = arith.cmpi eq, %arg0, %c0_i32 : i32
    %1 = arith.extui %0 : i1 to i32
    %c0_i32_0 = arith.constant 0 : i32
    %2 = arith.cmpi ne, %1, %c0_i32_0 : i32
    scf.if %2 {
      %cst_50 = arith.constant 0.000000e+00 : f32
      %250 = vector.broadcast %cst_50 : f32 to vector<8x32xf32>
      %c0_51 = arith.constant 0 : index
      %c0_52 = arith.constant 0 : index
      %251 = vector.load %arg7[%c0_51, %c0_52] : memref<8x32xf32, #tpu.memory_space<vmem>>, vector<8x32xf32>
      tpu.vector_store %arg7[%c0_51, %c0_52], %250 {strides = array<i32>} : memref<8x32xf32, #tpu.memory_space<vmem>>, vector<8x32xf32>,
    } else {
    }
    %c0 = arith.constant 0 : index
    %c0_1 = arith.constant 0 : index
    %3 = vector.load %arg2[%c0, %c0_1] : memref<32x96xf32, #tpu.memory_space<vmem>>, vector<32x96xf32>
    %c0_2 = arith.constant 0 : index
    %c0_3 = arith.constant 0 : index
    %4 = vector.load %arg3[%c0_2, %c0_3] : memref<1x32xf32, #tpu.memory_space<vmem>>, vector<1x32xf32>
    %c0_4 = arith.constant 0 : index
    %c0_5 = arith.constant 0 : index
    %5 = vector.load %arg7[%c0_4, %c0_5] : memref<8x32xf32, #tpu.memory_space<vmem>>, vector<8x32xf32>
    %c0_i32_6 = arith.constant 0 : i32
    %6 = arith.index_cast %c0_i32_6 : i32 to index
    %c0_7 = arith.constant 0 : index
    %c0_8 = arith.constant 0 : index
    %7 = vector.load %arg1[%6, %c0_7, %c0_8] : memref<8x8x96xf32, #tpu.memory_space<vmem>>, vector<1x8x96xf32>
    %8 = vector.shape_cast %7 : vector<1x8x96xf32> to vector<8x96xf32>
    %cst = arith.constant dense<0.000000e+00> : vector<8x96xf32>
    %9 = tpu.matmul %5, %3, %cst {dimension_numbers = #tpu.dot_dimension_numbers<[1], [0], [0], [1], [0, 0, 1, 1], [], []>} : vector<8x32xf32>, vector<32x96xf32>, vector<8x96xf32> -> vector<8x96xf32>
    %10 = vector.extract_strided_slice %8 {offsets = [0, 0], sizes = [8, 32], strides = [1, 1]} : vector<8x96xf32> to vector<8x32xf32>
    %11 = vector.extract_strided_slice %9 {offsets = [0, 0], sizes = [8, 32], strides = [1, 1]} : vector<8x96xf32> to vector<8x32xf32>
    %12 = arith.addf %10, %11 : vector<8x32xf32>
    %13 = arith.negf %12 : vector<8x32xf32>
    %14 = math.exp %13 : vector<8x32xf32>
    %cst_9 = arith.constant 1.000000e+00 : f32
    %15 = vector.broadcast %cst_9 : f32 to vector<8x32xf32>
    %16 = arith.addf %15, %14 : vector<8x32xf32>
    %17 = arith.divf %15, %16 : vector<8x32xf32>
    %18 = vector.extract_strided_slice %8 {offsets = [0, 32], sizes = [8, 32], strides = [1, 1]} : vector<8x96xf32> to vector<8x32xf32>
    %19 = vector.extract_strided_slice %9 {offsets = [0, 32], sizes = [8, 32], strides = [1, 1]} : vector<8x96xf32> to vector<8x32xf32>
    %20 = arith.addf %18, %19 : vector<8x32xf32>
    %21 = arith.negf %20 : vector<8x32xf32>
    %22 = math.exp %21 : vector<8x32xf32>
    %cst_10 = arith.constant 1.000000e+00 : f32
    %23 = vector.broadcast %cst_10 : f32 to vector<8x32xf32>
    %24 = arith.addf %23, %22 : vector<8x32xf32>
    %25 = arith.divf %23, %24 : vector<8x32xf32>
    %26 = vector.extract_strided_slice %8 {offsets = [0, 64], sizes = [8, 32], strides = [1, 1]} : vector<8x96xf32> to vector<8x32xf32>
    %27 = vector.extract_strided_slice %9 {offsets = [0, 64], sizes = [8, 32], strides = [1, 1]} : vector<8x96xf32> to vector<8x32xf32>
    %28 = vector.broadcast %4 : vector<1x32xf32> to vector<8x32xf32>
    %29 = arith.addf %27, %28 : vector<8x32xf32>
    %30 = arith.mulf %17, %29 : vector<8x32xf32>
    %31 = arith.addf %26, %30 : vector<8x32xf32>
    %32 = math.tanh %31 : vector<8x32xf32>
    %33 = arith.subf %5, %32 : vector<8x32xf32>
    %34 = arith.mulf %25, %33 : vector<8x32xf32>
    %35 = arith.addf %32, %34 : vector<8x32xf32>
    %c1_i32 = arith.constant 1 : i32
    %36 = arith.index_cast %c1_i32 : i32 to index
    %c0_11 = arith.constant 0 : index
    %c0_12 = arith.constant 0 : index
    %37 = vector.load %arg1[%36, %c0_11, %c0_12] : memref<8x8x96xf32, #tpu.memory_space<vmem>>, vector<1x8x96xf32>
    %38 = vector.shape_cast %37 : vector<1x8x96xf32> to vector<8x96xf32>
    %cst_13 = arith.constant dense<0.000000e+00> : vector<8x96xf32>
    %39 = tpu.matmul %35, %3, %cst_13 {dimension_numbers = #tpu.dot_dimension_numbers<[1], [0], [0], [1], [0, 0, 1, 1], [], []>} : vector<8x32xf32>, vector<32x96xf32>, vector<8x96xf32> -> vector<8x96xf32>
    %40 = vector.extract_strided_slice %38 {offsets = [0, 0], sizes = [8, 32], strides = [1, 1]} : vector<8x96xf32> to vector<8x32xf32>
    %41 = vector.extract_strided_slice %39 {offsets = [0, 0], sizes = [8, 32], strides = [1, 1]} : vector<8x96xf32> to vector<8x32xf32>
    %42 = arith.addf %40, %41 : vector<8x32xf32>
    %43 = arith.negf %42 : vector<8x32xf32>
    %44 = math.exp %43 : vector<8x32xf32>
    %cst_14 = arith.constant 1.000000e+00 : f32
    %45 = vector.broadcast %cst_14 : f32 to vector<8x32xf32>
    %46 = arith.addf %45, %44 : vector<8x32xf32>
    %47 = arith.divf %45, %46 : vector<8x32xf32>
    %48 = vector.extract_strided_slice %38 {offsets = [0, 32], sizes = [8, 32], strides = [1, 1]} : vector<8x96xf32> to vector<8x32xf32>
    %49 = vector.extract_strided_slice %39 {offsets = [0, 32], sizes = [8, 32], strides = [1, 1]} : vector<8x96xf32> to vector<8x32xf32>
    %50 = arith.addf %48, %49 : vector<8x32xf32>
    %51 = arith.negf %50 : vector<8x32xf32>
    %52 = math.exp %51 : vector<8x32xf32>
    %cst_15 = arith.constant 1.000000e+00 : f32
    %53 = vector.broadcast %cst_15 : f32 to vector<8x32xf32>
    %54 = arith.addf %53, %52 : vector<8x32xf32>
    %55 = arith.divf %53, %54 : vector<8x32xf32>
    %56 = vector.extract_strided_slice %38 {offsets = [0, 64], sizes = [8, 32], strides = [1, 1]} : vector<8x96xf32> to vector<8x32xf32>
    %57 = vector.extract_strided_slice %39 {offsets = [0, 64], sizes = [8, 32], strides = [1, 1]} : vector<8x96xf32> to vector<8x32xf32>
    %58 = vector.broadcast %4 : vector<1x32xf32> to vector<8x32xf32>
    %59 = arith.addf %57, %58 : vector<8x32xf32>
    %60 = arith.mulf %47, %59 : vector<8x32xf32>
    %61 = arith.addf %56, %60 : vector<8x32xf32>
    %62 = math.tanh %61 : vector<8x32xf32>
    %63 = arith.subf %35, %62 : vector<8x32xf32>
    %64 = arith.mulf %55, %63 : vector<8x32xf32>
    %65 = arith.addf %62, %64 : vector<8x32xf32>
    %c2_i32 = arith.constant 2 : i32
    %66 = arith.index_cast %c2_i32 : i32 to index
    %c0_16 = arith.constant 0 : index
    %c0_17 = arith.constant 0 : index
    %67 = vector.load %arg1[%66, %c0_16, %c0_17] : memref<8x8x96xf32, #tpu.memory_space<vmem>>, vector<1x8x96xf32>
    %68 = vector.shape_cast %67 : vector<1x8x96xf32> to vector<8x96xf32>
    %cst_18 = arith.constant dense<0.000000e+00> : vector<8x96xf32>
    %69 = tpu.matmul %65, %3, %cst_18 {dimension_numbers = #tpu.dot_dimension_numbers<[1], [0], [0], [1], [0, 0, 1, 1], [], []>} : vector<8x32xf32>, vector<32x96xf32>, vector<8x96xf32> -> vector<8x96xf32>
    %70 = vector.extract_strided_slice %68 {offsets = [0, 0], sizes = [8, 32], strides = [1, 1]} : vector<8x96xf32> to vector<8x32xf32>
    %71 = vector.extract_strided_slice %69 {offsets = [0, 0], sizes = [8, 32], strides = [1, 1]} : vector<8x96xf32> to vector<8x32xf32>
    %72 = arith.addf %70, %71 : vector<8x32xf32>
    %73 = arith.negf %72 : vector<8x32xf32>
    %74 = math.exp %73 : vector<8x32xf32>
    %cst_19 = arith.constant 1.000000e+00 : f32
    %75 = vector.broadcast %cst_19 : f32 to vector<8x32xf32>
    %76 = arith.addf %75, %74 : vector<8x32xf32>
    %77 = arith.divf %75, %76 : vector<8x32xf32>
    %78 = vector.extract_strided_slice %68 {offsets = [0, 32], sizes = [8, 32], strides = [1, 1]} : vector<8x96xf32> to vector<8x32xf32>
    %79 = vector.extract_strided_slice %69 {offsets = [0, 32], sizes = [8, 32], strides = [1, 1]} : vector<8x96xf32> to vector<8x32xf32>
    %80 = arith.addf %78, %79 : vector<8x32xf32>
    %81 = arith.negf %80 : vector<8x32xf32>
    %82 = math.exp %81 : vector<8x32xf32>
    %cst_20 = arith.constant 1.000000e+00 : f32
    %83 = vector.broadcast %cst_20 : f32 to vector<8x32xf32>
    %84 = arith.addf %83, %82 : vector<8x32xf32>
    %85 = arith.divf %83, %84 : vector<8x32xf32>
    %86 = vector.extract_strided_slice %68 {offsets = [0, 64], sizes = [8, 32], strides = [1, 1]} : vector<8x96xf32> to vector<8x32xf32>
    %87 = vector.extract_strided_slice %69 {offsets = [0, 64], sizes = [8, 32], strides = [1, 1]} : vector<8x96xf32> to vector<8x32xf32>
    %88 = vector.broadcast %4 : vector<1x32xf32> to vector<8x32xf32>
    %89 = arith.addf %87, %88 : vector<8x32xf32>
    %90 = arith.mulf %77, %89 : vector<8x32xf32>
    %91 = arith.addf %86, %90 : vector<8x32xf32>
    %92 = math.tanh %91 : vector<8x32xf32>
    %93 = arith.subf %65, %92 : vector<8x32xf32>
    %94 = arith.mulf %85, %93 : vector<8x32xf32>
    %95 = arith.addf %92, %94 : vector<8x32xf32>
    %c3_i32 = arith.constant 3 : i32
    %96 = arith.index_cast %c3_i32 : i32 to index
    %c0_21 = arith.constant 0 : index
    %c0_22 = arith.constant 0 : index
    %97 = vector.load %arg1[%96, %c0_21, %c0_22] : memref<8x8x96xf32, #tpu.memory_space<vmem>>, vector<1x8x96xf32>
    %98 = vector.shape_cast %97 : vector<1x8x96xf32> to vector<8x96xf32>
    %cst_23 = arith.constant dense<0.000000e+00> : vector<8x96xf32>
    %99 = tpu.matmul %95, %3, %cst_23 {dimension_numbers = #tpu.dot_dimension_numbers<[1], [0], [0], [1], [0, 0, 1, 1], [], []>} : vector<8x32xf32>, vector<32x96xf32>, vector<8x96xf32> -> vector<8x96xf32>
    %100 = vector.extract_strided_slice %98 {offsets = [0, 0], sizes = [8, 32], strides = [1, 1]} : vector<8x96xf32> to vector<8x32xf32>
    %101 = vector.extract_strided_slice %99 {offsets = [0, 0], sizes = [8, 32], strides = [1, 1]} : vector<8x96xf32> to vector<8x32xf32>
    %102 = arith.addf %100, %101 : vector<8x32xf32>
    %103 = arith.negf %102 : vector<8x32xf32>
    %104 = math.exp %103 : vector<8x32xf32>
    %cst_24 = arith.constant 1.000000e+00 : f32
    %105 = vector.broadcast %cst_24 : f32 to vector<8x32xf32>
    %106 = arith.addf %105, %104 : vector<8x32xf32>
    %107 = arith.divf %105, %106 : vector<8x32xf32>
    %108 = vector.extract_strided_slice %98 {offsets = [0, 32], sizes = [8, 32], strides = [1, 1]} : vector<8x96xf32> to vector<8x32xf32>
    %109 = vector.extract_strided_slice %99 {offsets = [0, 32], sizes = [8, 32], strides = [1, 1]} : vector<8x96xf32> to vector<8x32xf32>
    %110 = arith.addf %108, %109 : vector<8x32xf32>
    %111 = arith.negf %110 : vector<8x32xf32>
    %112 = math.exp %111 : vector<8x32xf32>
    %cst_25 = arith.constant 1.000000e+00 : f32
    %113 = vector.broadcast %cst_25 : f32 to vector<8x32xf32>
    %114 = arith.addf %113, %112 : vector<8x32xf32>
    %115 = arith.divf %113, %114 : vector<8x32xf32>
    %116 = vector.extract_strided_slice %98 {offsets = [0, 64], sizes = [8, 32], strides = [1, 1]} : vector<8x96xf32> to vector<8x32xf32>
    %117 = vector.extract_strided_slice %99 {offsets = [0, 64], sizes = [8, 32], strides = [1, 1]} : vector<8x96xf32> to vector<8x32xf32>
    %118 = vector.broadcast %4 : vector<1x32xf32> to vector<8x32xf32>
    %119 = arith.addf %117, %118 : vector<8x32xf32>
    %120 = arith.mulf %107, %119 : vector<8x32xf32>
    %121 = arith.addf %116, %120 : vector<8x32xf32>
    %122 = math.tanh %121 : vector<8x32xf32>
    %123 = arith.subf %95, %122 : vector<8x32xf32>
    %124 = arith.mulf %115, %123 : vector<8x32xf32>
    %125 = arith.addf %122, %124 : vector<8x32xf32>
    %c4_i32 = arith.constant 4 : i32
    %126 = arith.index_cast %c4_i32 : i32 to index
    %c0_26 = arith.constant 0 : index
    %c0_27 = arith.constant 0 : index
    %127 = vector.load %arg1[%126, %c0_26, %c0_27] : memref<8x8x96xf32, #tpu.memory_space<vmem>>, vector<1x8x96xf32>
    %128 = vector.shape_cast %127 : vector<1x8x96xf32> to vector<8x96xf32>
    %cst_28 = arith.constant dense<0.000000e+00> : vector<8x96xf32>
    %129 = tpu.matmul %125, %3, %cst_28 {dimension_numbers = #tpu.dot_dimension_numbers<[1], [0], [0], [1], [0, 0, 1, 1], [], []>} : vector<8x32xf32>, vector<32x96xf32>, vector<8x96xf32> -> vector<8x96xf32>
    %130 = vector.extract_strided_slice %128 {offsets = [0, 0], sizes = [8, 32], strides = [1, 1]} : vector<8x96xf32> to vector<8x32xf32>
    %131 = vector.extract_strided_slice %129 {offsets = [0, 0], sizes = [8, 32], strides = [1, 1]} : vector<8x96xf32> to vector<8x32xf32>
    %132 = arith.addf %130, %131 : vector<8x32xf32>
    %133 = arith.negf %132 : vector<8x32xf32>
    %134 = math.exp %133 : vector<8x32xf32>
    %cst_29 = arith.constant 1.000000e+00 : f32
    %135 = vector.broadcast %cst_29 : f32 to vector<8x32xf32>
    %136 = arith.addf %135, %134 : vector<8x32xf32>
    %137 = arith.divf %135, %136 : vector<8x32xf32>
    %138 = vector.extract_strided_slice %128 {offsets = [0, 32], sizes = [8, 32], strides = [1, 1]} : vector<8x96xf32> to vector<8x32xf32>
    %139 = vector.extract_strided_slice %129 {offsets = [0, 32], sizes = [8, 32], strides = [1, 1]} : vector<8x96xf32> to vector<8x32xf32>
    %140 = arith.addf %138, %139 : vector<8x32xf32>
    %141 = arith.negf %140 : vector<8x32xf32>
    %142 = math.exp %141 : vector<8x32xf32>
    %cst_30 = arith.constant 1.000000e+00 : f32
    %143 = vector.broadcast %cst_30 : f32 to vector<8x32xf32>
    %144 = arith.addf %143, %142 : vector<8x32xf32>
    %145 = arith.divf %143, %144 : vector<8x32xf32>
    %146 = vector.extract_strided_slice %128 {offsets = [0, 64], sizes = [8, 32], strides = [1, 1]} : vector<8x96xf32> to vector<8x32xf32>
    %147 = vector.extract_strided_slice %129 {offsets = [0, 64], sizes = [8, 32], strides = [1, 1]} : vector<8x96xf32> to vector<8x32xf32>
    %148 = vector.broadcast %4 : vector<1x32xf32> to vector<8x32xf32>
    %149 = arith.addf %147, %148 : vector<8x32xf32>
    %150 = arith.mulf %137, %149 : vector<8x32xf32>
    %151 = arith.addf %146, %150 : vector<8x32xf32>
    %152 = math.tanh %151 : vector<8x32xf32>
    %153 = arith.subf %125, %152 : vector<8x32xf32>
    %154 = arith.mulf %145, %153 : vector<8x32xf32>
    %155 = arith.addf %152, %154 : vector<8x32xf32>
    %c5_i32 = arith.constant 5 : i32
    %156 = arith.index_cast %c5_i32 : i32 to index
    %c0_31 = arith.constant 0 : index
    %c0_32 = arith.constant 0 : index
    %157 = vector.load %arg1[%156, %c0_31, %c0_32] : memref<8x8x96xf32, #tpu.memory_space<vmem>>, vector<1x8x96xf32>
    %158 = vector.shape_cast %157 : vector<1x8x96xf32> to vector<8x96xf32>
    %cst_33 = arith.constant dense<0.000000e+00> : vector<8x96xf32>
    %159 = tpu.matmul %155, %3, %cst_33 {dimension_numbers = #tpu.dot_dimension_numbers<[1], [0], [0], [1], [0, 0, 1, 1], [], []>} : vector<8x32xf32>, vector<32x96xf32>, vector<8x96xf32> -> vector<8x96xf32>
    %160 = vector.extract_strided_slice %158 {offsets = [0, 0], sizes = [8, 32], strides = [1, 1]} : vector<8x96xf32> to vector<8x32xf32>
    %161 = vector.extract_strided_slice %159 {offsets = [0, 0], sizes = [8, 32], strides = [1, 1]} : vector<8x96xf32> to vector<8x32xf32>
    %162 = arith.addf %160, %161 : vector<8x32xf32>
    %163 = arith.negf %162 : vector<8x32xf32>
    %164 = math.exp %163 : vector<8x32xf32>
    %cst_34 = arith.constant 1.000000e+00 : f32
    %165 = vector.broadcast %cst_34 : f32 to vector<8x32xf32>
    %166 = arith.addf %165, %164 : vector<8x32xf32>
    %167 = arith.divf %165, %166 : vector<8x32xf32>
    %168 = vector.extract_strided_slice %158 {offsets = [0, 32], sizes = [8, 32], strides = [1, 1]} : vector<8x96xf32> to vector<8x32xf32>
    %169 = vector.extract_strided_slice %159 {offsets = [0, 32], sizes = [8, 32], strides = [1, 1]} : vector<8x96xf32> to vector<8x32xf32>
    %170 = arith.addf %168, %169 : vector<8x32xf32>
    %171 = arith.negf %170 : vector<8x32xf32>
    %172 = math.exp %171 : vector<8x32xf32>
    %cst_35 = arith.constant 1.000000e+00 : f32
    %173 = vector.broadcast %cst_35 : f32 to vector<8x32xf32>
    %174 = arith.addf %173, %172 : vector<8x32xf32>
    %175 = arith.divf %173, %174 : vector<8x32xf32>
    %176 = vector.extract_strided_slice %158 {offsets = [0, 64], sizes = [8, 32], strides = [1, 1]} : vector<8x96xf32> to vector<8x32xf32>
    %177 = vector.extract_strided_slice %159 {offsets = [0, 64], sizes = [8, 32], strides = [1, 1]} : vector<8x96xf32> to vector<8x32xf32>
    %178 = vector.broadcast %4 : vector<1x32xf32> to vector<8x32xf32>
    %179 = arith.addf %177, %178 : vector<8x32xf32>
    %180 = arith.mulf %167, %179 : vector<8x32xf32>
    %181 = arith.addf %176, %180 : vector<8x32xf32>
    %182 = math.tanh %181 : vector<8x32xf32>
    %183 = arith.subf %155, %182 : vector<8x32xf32>
    %184 = arith.mulf %175, %183 : vector<8x32xf32>
    %185 = arith.addf %182, %184 : vector<8x32xf32>
    %c6_i32 = arith.constant 6 : i32
    %186 = arith.index_cast %c6_i32 : i32 to index
    %c0_36 = arith.constant 0 : index
    %c0_37 = arith.constant 0 : index
    %187 = vector.load %arg1[%186, %c0_36, %c0_37] : memref<8x8x96xf32, #tpu.memory_space<vmem>>, vector<1x8x96xf32>
    %188 = vector.shape_cast %187 : vector<1x8x96xf32> to vector<8x96xf32>
    %cst_38 = arith.constant dense<0.000000e+00> : vector<8x96xf32>
    %189 = tpu.matmul %185, %3, %cst_38 {dimension_numbers = #tpu.dot_dimension_numbers<[1], [0], [0], [1], [0, 0, 1, 1], [], []>} : vector<8x32xf32>, vector<32x96xf32>, vector<8x96xf32> -> vector<8x96xf32>
    %190 = vector.extract_strided_slice %188 {offsets = [0, 0], sizes = [8, 32], strides = [1, 1]} : vector<8x96xf32> to vector<8x32xf32>
    %191 = vector.extract_strided_slice %189 {offsets = [0, 0], sizes = [8, 32], strides = [1, 1]} : vector<8x96xf32> to vector<8x32xf32>
    %192 = arith.addf %190, %191 : vector<8x32xf32>
    %193 = arith.negf %192 : vector<8x32xf32>
    %194 = math.exp %193 : vector<8x32xf32>
    %cst_39 = arith.constant 1.000000e+00 : f32
    %195 = vector.broadcast %cst_39 : f32 to vector<8x32xf32>
    %196 = arith.addf %195, %194 : vector<8x32xf32>
    %197 = arith.divf %195, %196 : vector<8x32xf32>
    %198 = vector.extract_strided_slice %188 {offsets = [0, 32], sizes = [8, 32], strides = [1, 1]} : vector<8x96xf32> to vector<8x32xf32>
    %199 = vector.extract_strided_slice %189 {offsets = [0, 32], sizes = [8, 32], strides = [1, 1]} : vector<8x96xf32> to vector<8x32xf32>
    %200 = arith.addf %198, %199 : vector<8x32xf32>
    %201 = arith.negf %200 : vector<8x32xf32>
    %202 = math.exp %201 : vector<8x32xf32>
    %cst_40 = arith.constant 1.000000e+00 : f32
    %203 = vector.broadcast %cst_40 : f32 to vector<8x32xf32>
    %204 = arith.addf %203, %202 : vector<8x32xf32>
    %205 = arith.divf %203, %204 : vector<8x32xf32>
    %206 = vector.extract_strided_slice %188 {offsets = [0, 64], sizes = [8, 32], strides = [1, 1]} : vector<8x96xf32> to vector<8x32xf32>
    %207 = vector.extract_strided_slice %189 {offsets = [0, 64], sizes = [8, 32], strides = [1, 1]} : vector<8x96xf32> to vector<8x32xf32>
    %208 = vector.broadcast %4 : vector<1x32xf32> to vector<8x32xf32>
    %209 = arith.addf %207, %208 : vector<8x32xf32>
    %210 = arith.mulf %197, %209 : vector<8x32xf32>
    %211 = arith.addf %206, %210 : vector<8x32xf32>
    %212 = math.tanh %211 : vector<8x32xf32>
    %213 = arith.subf %185, %212 : vector<8x32xf32>
    %214 = arith.mulf %205, %213 : vector<8x32xf32>
    %215 = arith.addf %212, %214 : vector<8x32xf32>
    %c7_i32 = arith.constant 7 : i32
    %216 = arith.index_cast %c7_i32 : i32 to index
    %c0_41 = arith.constant 0 : index
    %c0_42 = arith.constant 0 : index
    %217 = vector.load %arg1[%216, %c0_41, %c0_42] : memref<8x8x96xf32, #tpu.memory_space<vmem>>, vector<1x8x96xf32>
    %218 = vector.shape_cast %217 : vector<1x8x96xf32> to vector<8x96xf32>
    %cst_43 = arith.constant dense<0.000000e+00> : vector<8x96xf32>
    %219 = tpu.matmul %215, %3, %cst_43 {dimension_numbers = #tpu.dot_dimension_numbers<[1], [0], [0], [1], [0, 0, 1, 1], [], []>} : vector<8x32xf32>, vector<32x96xf32>, vector<8x96xf32> -> vector<8x96xf32>
    %220 = vector.extract_strided_slice %218 {offsets = [0, 0], sizes = [8, 32], strides = [1, 1]} : vector<8x96xf32> to vector<8x32xf32>
    %221 = vector.extract_strided_slice %219 {offsets = [0, 0], sizes = [8, 32], strides = [1, 1]} : vector<8x96xf32> to vector<8x32xf32>
    %222 = arith.addf %220, %221 : vector<8x32xf32>
    %223 = arith.negf %222 : vector<8x32xf32>
    %224 = math.exp %223 : vector<8x32xf32>
    %cst_44 = arith.constant 1.000000e+00 : f32
    %225 = vector.broadcast %cst_44 : f32 to vector<8x32xf32>
    %226 = arith.addf %225, %224 : vector<8x32xf32>
    %227 = arith.divf %225, %226 : vector<8x32xf32>
    %228 = vector.extract_strided_slice %218 {offsets = [0, 32], sizes = [8, 32], strides = [1, 1]} : vector<8x96xf32> to vector<8x32xf32>
    %229 = vector.extract_strided_slice %219 {offsets = [0, 32], sizes = [8, 32], strides = [1, 1]} : vector<8x96xf32> to vector<8x32xf32>
    %230 = arith.addf %228, %229 : vector<8x32xf32>
    %231 = arith.negf %230 : vector<8x32xf32>
    %232 = math.exp %231 : vector<8x32xf32>
    %cst_45 = arith.constant 1.000000e+00 : f32
    %233 = vector.broadcast %cst_45 : f32 to vector<8x32xf32>
    %234 = arith.addf %233, %232 : vector<8x32xf32>
    %235 = arith.divf %233, %234 : vector<8x32xf32>
    %236 = vector.extract_strided_slice %218 {offsets = [0, 64], sizes = [8, 32], strides = [1, 1]} : vector<8x96xf32> to vector<8x32xf32>
    %237 = vector.extract_strided_slice %219 {offsets = [0, 64], sizes = [8, 32], strides = [1, 1]} : vector<8x96xf32> to vector<8x32xf32>
    %238 = vector.broadcast %4 : vector<1x32xf32> to vector<8x32xf32>
    %239 = arith.addf %237, %238 : vector<8x32xf32>
    %240 = arith.mulf %227, %239 : vector<8x32xf32>
    %241 = arith.addf %236, %240 : vector<8x32xf32>
    %242 = math.tanh %241 : vector<8x32xf32>
    %243 = arith.subf %215, %242 : vector<8x32xf32>
    %244 = arith.mulf %235, %243 : vector<8x32xf32>
    %245 = arith.addf %242, %244 : vector<8x32xf32>
    %c8_i32 = arith.constant 8 : i32
    %c0_46 = arith.constant 0 : index
    %c0_47 = arith.constant 0 : index
    %246 = vector.load %arg7[%c0_46, %c0_47] : memref<8x32xf32, #tpu.memory_space<vmem>>, vector<8x32xf32>
    tpu.vector_store %arg7[%c0_46, %c0_47], %245 {strides = array<i32>} : memref<8x32xf32, #tpu.memory_space<vmem>>, vector<8x32xf32>,
    %c1_i32_48 = arith.constant 1 : i32
    %247 = arith.cmpi eq, %arg0, %c1_i32_48 : i32
    %248 = arith.extui %247 : i1 to i32
    %c0_i32_49 = arith.constant 0 : i32
    %249 = arith.cmpi ne, %248, %c0_i32_49 : i32
    scf.if %249 {
      %c0_50 = arith.constant 0 : index
      %c0_51 = arith.constant 0 : index
      %250 = vector.load %arg4[%c0_50, %c0_51] : memref<32x2xf32, #tpu.memory_space<vmem>>, vector<32x2xf32>
      %cst_52 = arith.constant dense<0.000000e+00> : vector<8x2xf32>
      %251 = tpu.matmul %245, %250, %cst_52 {dimension_numbers = #tpu.dot_dimension_numbers<[1], [0], [0], [1], [0, 0, 1, 1], [], []>} : vector<8x32xf32>, vector<32x2xf32>, vector<8x2xf32> -> vector<8x2xf32>
      %c0_53 = arith.constant 0 : index
      %c0_54 = arith.constant 0 : index
      %252 = vector.load %arg5[%c0_53, %c0_54] : memref<1x2xf32, #tpu.memory_space<vmem>>, vector<1x2xf32>
      %253 = vector.broadcast %252 : vector<1x2xf32> to vector<8x2xf32>
      %254 = arith.addf %251, %253 : vector<8x2xf32>
      %c0_55 = arith.constant 0 : index
      %c0_56 = arith.constant 0 : index
      %255 = vector.load %arg6[%c0_55, %c0_56] : memref<8x2xf32, #tpu.memory_space<vmem>>, vector<8x2xf32>
      tpu.vector_store %arg6[%c0_55, %c0_56], %254 {strides = array<i32>} : memref<8x2xf32, #tpu.memory_space<vmem>>, vector<8x2xf32>,
    } else {
    }
    return
  }
  func.func @transform_0(%arg0: i32) -> (i32, i32, i32) {
    %c0_i32 = arith.constant 0 : i32
    %c0_i32_0 = arith.constant 0 : i32
    %c0_i32_1 = arith.constant 0 : i32
    return %arg0, %c0_i32, %c0_i32_0 : i32, i32, i32
  }
  func.func @transform_1(%arg0: i32) -> (i32, i32) {
    %c0_i32 = arith.constant 0 : i32
    %c0_i32_0 = arith.constant 0 : i32
    %c0_i32_1 = arith.constant 0 : i32
    return %c0_i32, %c0_i32_0 : i32, i32
  }
  func.func @transform_2(%arg0: i32) -> (i32, i32) {
    %c0_i32 = arith.constant 0 : i32
    %c0_i32_0 = arith.constant 0 : i32
    %c0_i32_1 = arith.constant 0 : i32
    return %c0_i32, %c0_i32_0 : i32, i32
  }
  func.func @transform_3(%arg0: i32) -> (i32, i32) {
    %c0_i32 = arith.constant 0 : i32
    %c0_i32_0 = arith.constant 0 : i32
    %c0_i32_1 = arith.constant 0 : i32
    return %c0_i32, %c0_i32_0 : i32, i32
  }
  func.func @transform_4(%arg0: i32) -> (i32, i32) {
    %c0_i32 = arith.constant 0 : i32
    %c0_i32_0 = arith.constant 0 : i32
    %c0_i32_1 = arith.constant 0 : i32
    return %c0_i32, %c0_i32_0 : i32, i32
  }
  func.func @transform_5(%arg0: i32) -> (i32, i32) {
    %c0_i32 = arith.constant 0 : i32
    %c0_i32_0 = arith.constant 0 : i32
    %c0_i32_1 = arith.constant 0 : i32
    return %c0_i32, %c0_i32_0 : i32, i32
  }
}

</mosaic_0001>

<llo_original>
// kernel: tpu_custom_call.1
$region0: #{tpu_custom_call.1}
  #allocation0 [shape = 'u32[]', space=smem, size = 0x4, offset = 0x4, fixed_abs, tag = 'smem constant byte address 0x4 - core index']
  #allocation1 [shape = 'u32[144,128]{1,0:T(1,128)}', space=vmem, size = 0x12000, scoped, tag = 'internal scratch']
  #allocation2 [shape = 'f32[8,32]{1,0:T(8,128)}', space=vmem, size = 0x1000, scoped, tag = 'scratch operand']
  %s0 = inlined_call_operand.hbm [shape: f32[16,8,96], index: 0, kind: input, shape index: {}]
  %s1 = inlined_call_operand.vmem [shape: f32[32,96], index: 1, kind: input, shape index: {}]
  %s2 = inlined_call_operand.vmem [shape: f32[1,32], index: 2, kind: input, shape index: {}]
  %s3 = inlined_call_operand.vmem [shape: f32[32,2], index: 3, kind: input, shape index: {}]
  %s4 = inlined_call_operand.vmem [shape: f32[1,2], index: 4, kind: input, shape index: {}]
  %s5 = inlined_call_operand.vmem [shape: f32[8,2], index: 5, kind: output, shape index: {}]
  %s6 = sld [smem:[#allocation0]]
  $region65: #{tpu_custom_call.1} parent=0
    _
  %s8 = ssub.s32 1, %s6
  %s9 = scalar_select 0, %s8, %s6
  $region1: #{tpu_custom_call.1} parent=0
    #allocation3 [shape = 'u8[65536]{0}', space=vmem, size = 0x10000, scoped, tag = 'input window, operand 0']
    #allocation4 [shape = 's32[2]{0}', space=sflag, size = 0x8, scoped, tag = 'scoped memory for tpu_custom_call.1']
    %10 = vsyncpa [#allocation4], 0
    %s11 = scalar_lea.sflag [#allocation4], 1
    %12 = vsyncpa %s11, 0
    loop: start=0, step=1, limit=4
    $region2: #{tpu_custom_call.1} parent=1 // loop_pre_header
      _
    $region3: #{tpu_custom_call.1} parent=1 // loop_header
      %s14 = sphi 0, %s18
      %p15 = scmp.ge.s32.totalorder %s14, 4
      %s24 = sphi 0, %s26
      %s27 = sphi 0, %s24
      %s28 = sphi 0, %s27
      %s44 = sphi 0, %s28
      %s48 = sphi 0, %s48
      %s50 = sphi 0, %s48
      %s51 = sphi 0, %s50
      %s65 = sphi 0, %s51
      %s69 = sphi 0, %s69
      %s71 = sphi 0, %s69
      %s72 = sphi 0, %s71
      %s86 = sphi 0, %s72
      %s90 = sphi 0, %s90
      %s92 = sphi 0, %s90
      %s93 = sphi 0, %s92
      %s107 = sphi 0, %s93
      %s111 = sphi 0, %s111
      %s113 = sphi 0, %s111
      %s114 = sphi 0, %s113
      %s128 = sphi 0, %s114
      %s132 = sphi 0, %s132
      %s134 = sphi 0, %s132
      %s135 = sphi 0, %s134
      %s149 = sphi 0, %s135
    $region4: #{tpu_custom_call.1} parent=1 // loop_header_branch
      %17 = sbr.rel (%p15) target = $region8
    $region5: #{tpu_custom_call.1} parent=1 // loop_body
      %s19 = ssub.s32 %s14, 1
      %s20 = ssub.s32 %s14, 2
      %s21 = sadd.s32 %s14, 1
      %s22 = ssub.s32 %s14, %s21
      %p23 = scmp.eq.s32.totalorder %s22, 0
      %s25 = sadd.s32 %s24, 1
      %s26 = scalar_select %p23, %s24, %s25
      %p29 = pneg %p23
      %p30 = scmp.eq.s32.totalorder %s14, 1
      %p31 = por %p29, %p30
      %p32 = scmp.ne.s32.totalorder %s24, %s27
      %p33 = scmp.eq.s32.totalorder %s14, 0
      %p34 = por %p32, %p33
      %p35 = scmp.ne.s32.totalorder %s24, %s27
      %p36 = scmp.eq.s32.totalorder %s19, 1
      %p37 = por %p35, %p36
      %p38 = scmp.ne.s32.totalorder %s27, %s28
      %p39 = scmp.eq.s32.totalorder %s19, 0
      %p40 = por %p38, %p39
      %p41 = scmp.ne.s32.totalorder %s27, %s28
      %p42 = scmp.eq.s32.totalorder %s20, 1
      %p43 = por %p41, %p42
      %p45 = scmp.ne.s32.totalorder %s28, %s44
      %p46 = scmp.eq.s32.totalorder %s20, 0
      %p47 = por %p45, %p46
      %s49 = sadd.s32 %s48, 1
      %p52 = scmp.eq.s32.totalorder %s14, 1
      %p53 = scmp.ne.s32.totalorder %s48, %s50
      %p54 = scmp.eq.s32.totalorder %s14, 0
      %p55 = por %p53, %p54
      %p56 = scmp.ne.s32.totalorder %s48, %s50
      %p57 = scmp.eq.s32.totalorder %s19, 1
      %p58 = por %p56, %p57
      %p59 = scmp.ne.s32.totalorder %s50, %s51
      %p60 = scmp.eq.s32.totalorder %s19, 0
      %p61 = por %p59, %p60
      %p62 = scmp.ne.s32.totalorder %s50, %s51
      %p63 = scmp.eq.s32.totalorder %s20, 1
      %p64 = por %p62, %p63
      %p66 = scmp.ne.s32.totalorder %s51, %s65
      %p67 = scmp.eq.s32.totalorder %s20, 0
      %p68 = por %p66, %p67
      %s70 = sadd.s32 %s69, 1
      %p73 = scmp.eq.s32.totalorder %s14, 1
      %p74 = scmp.ne.s32.totalorder %s69, %s71
      %p75 = scmp.eq.s32.totalorder %s14, 0
      %p76 = por %p74, %p75
      %p77 = scmp.ne.s32.totalorder %s69, %s71
      %p78 = scmp.eq.s32.totalorder %s19, 1
      %p79 = por %p77, %p78
      %p80 = scmp.ne.s32.totalorder %s71, %s72
      %p81 = scmp.eq.s32.totalorder %s19, 0
      %p82 = por %p80, %p81
      %p83 = scmp.ne.s32.totalorder %s71, %s72
      %p84 = scmp.eq.s32.totalorder %s20, 1
      %p85 = por %p83, %p84
      %p87 = scmp.ne.s32.totalorder %s72, %s86
      %p88 = scmp.eq.s32.totalorder %s20, 0
      %p89 = por %p87, %p88
      %s91 = sadd.s32 %s90, 1
      %p94 = scmp.eq.s32.totalorder %s14, 1
      %p95 = scmp.ne.s32.totalorder %s90, %s92
      %p96 = scmp.eq.s32.totalorder %s14, 0
      %p97 = por %p95, %p96
      %p98 = scmp.ne.s32.totalorder %s90, %s92
      %p99 = scmp.eq.s32.totalorder %s19, 1
      %p100 = por %p98, %p99
      %p101 = scmp.ne.s32.totalorder %s92, %s93
      %p102 = scmp.eq.s32.totalorder %s19, 0
      %p103 = por %p101, %p102
      %p104 = scmp.ne.s32.totalorder %s92, %s93
      %p105 = scmp.eq.s32.totalorder %s20, 1
      %p106 = por %p104, %p105
      %p108 = scmp.ne.s32.totalorder %s93, %s107
      %p109 = scmp.eq.s32.totalorder %s20, 0
      %p110 = por %p108, %p109
      %s112 = sadd.s32 %s111, 1
      %p115 = scmp.eq.s32.totalorder %s14, 1
      %p116 = scmp.ne.s32.totalorder %s111, %s113
      %p117 = scmp.eq.s32.totalorder %s14, 0
      %p118 = por %p116, %p117
      %p119 = scmp.ne.s32.totalorder %s111, %s113
      %p120 = scmp.eq.s32.totalorder %s19, 1
      %p121 = por %p119, %p120
      %p122 = scmp.ne.s32.totalorder %s113, %s114
      %p123 = scmp.eq.s32.totalorder %s19, 0
      %p124 = por %p122, %p123
      %p125 = scmp.ne.s32.totalorder %s113, %s114
      %p126 = scmp.eq.s32.totalorder %s20, 1
      %p127 = por %p125, %p126
      %p129 = scmp.ne.s32.totalorder %s114, %s128
      %p130 = scmp.eq.s32.totalorder %s20, 0
      %p131 = por %p129, %p130
      %s133 = sadd.s32 %s132, 1
      %p136 = scmp.eq.s32.totalorder %s14, 1
      %p137 = scmp.ne.s32.totalorder %s132, %s134
      %p138 = scmp.eq.s32.totalorder %s14, 0
      %p139 = por %p137, %p138
      %p140 = scmp.ne.s32.totalorder %s132, %s134
      %p141 = scmp.eq.s32.totalorder %s19, 1
      %p142 = por %p140, %p141
      %p143 = scmp.ne.s32.totalorder %s134, %s135
      %p144 = scmp.eq.s32.totalorder %s19, 0
      %p145 = por %p143, %p144
      %p146 = scmp.ne.s32.totalorder %s134, %s135
      %p147 = scmp.eq.s32.totalorder %s20, 1
      %p148 = por %p146, %p147
      %p150 = scmp.ne.s32.totalorder %s135, %s149
      %p151 = scmp.eq.s32.totalorder %s20, 0
      %p152 = por %p150, %p151
      %p153 = scmp.le.s32.totalorder 1, %s14
      %p154 = scmp.lt.s32.totalorder %s14, 3
      %p155 = pnand %p153, %p154
      %p156 = pneg %p155
      // Predicated region
      $region9: #{tpu_custom_call.1} parent=5 // pred_check
        _
      $region10: #{tpu_custom_call.1} parent=5 // pred_check_branch
        %158 = sbr.rel (%p155) target = $region12
      $region11: #{tpu_custom_call.1} parent=5 // pred_region
        %s159 = ssub.s32 %s14, 1
        // Predicated region
        $region13: #{tpu_custom_call.1} parent=11 // pred_check
          %p160 = pneg %p61
        $region14: #{tpu_custom_call.1} parent=11 // pred_check_branch
          %162 = sbr.rel (%p160) target = $region16
        $region15: #{tpu_custom_call.1} parent=11 // pred_region
          _
        $region16: #{tpu_custom_call.1} parent=11 // pred_fallthru
          _
        // Predicated region
        $region17: #{tpu_custom_call.1} parent=11 // pred_check
          %p163 = pneg %p82
        $region18: #{tpu_custom_call.1} parent=11 // pred_check_branch
          %165 = sbr.rel (%p163) target = $region20
        $region19: #{tpu_custom_call.1} parent=11 // pred_region
          _
        $region20: #{tpu_custom_call.1} parent=11 // pred_fallthru
          _
        // Predicated region
        $region21: #{tpu_custom_call.1} parent=11 // pred_check
          %p166 = pneg %p103
        $region22: #{tpu_custom_call.1} parent=11 // pred_check_branch
          %168 = sbr.rel (%p166) target = $region24
        $region23: #{tpu_custom_call.1} parent=11 // pred_region
          _
        $region24: #{tpu_custom_call.1} parent=11 // pred_fallthru
          _
        // Predicated region
        $region25: #{tpu_custom_call.1} parent=11 // pred_check
          %p169 = pneg %p124
        $region26: #{tpu_custom_call.1} parent=11 // pred_check_branch
          %171 = sbr.rel (%p169) target = $region28
        $region27: #{tpu_custom_call.1} parent=11 // pred_region
          _
        $region28: #{tpu_custom_call.1} parent=11 // pred_fallthru
          _
      $region12: #{tpu_custom_call.1} parent=5 // pred_fallthru
        _
      %p172 = scmp.lt.s32.totalorder %s14, 2
      // Predicated region
      $region29: #{tpu_custom_call.1} parent=5 // pred_check
        %p173 = pneg %p172
      $region30: #{tpu_custom_call.1} parent=5 // pred_check_branch
        %175 = sbr.rel (%p173) target = $region32
      $region31: #{tpu_custom_call.1} parent=5 // pred_region
        // Predicated region
        $region33: #{tpu_custom_call.1} parent=31 // pred_check
          %p176 = pneg %p34
        $region34: #{tpu_custom_call.1} parent=31 // pred_check_branch
          %178 = sbr.rel (%p176) target = $region36
        $region35: #{tpu_custom_call.1} parent=31 // pred_region
          %s179 = sand.u32 %s24, 1
          %s180 = scalar_lea.sflag [#allocation4], %s179
          %s181 = sand.u32 %s24, 1
          %s182 = smul.addr %s181, 64
          %s183 = scalar_lea.vmem [#allocation3], %s182
          %s184 = smul.u32 8, %s14
          %s186 = ssub.s32 1024, 1024
          %187 = vsyncadd %s180, %s186
          %s188 = smul.addr %s184, 128
          %s189 = scalar_lea.hbm %s0, %s188
          %s190 = sshll.u32 %s183, 4
          %s191 = int_to_ptr.vmem [resolvable:$true] %s190
          %196 = dma.hbm_to_vmem [thread:$0]  %s189, 1024, %s191, %s180, 128, 128, 8
        $region36: #{tpu_custom_call.1} parent=31 // pred_fallthru
          _
      $region32: #{tpu_custom_call.1} parent=5 // pred_fallthru
        _
      %p197 = scmp.le.s32.totalorder 1, %s14
      %p198 = scmp.lt.s32.totalorder %s14, 3
      %p199 = pnand %p197, %p198
      %p200 = pneg %p199
      // Predicated region
      $region37: #{tpu_custom_call.1} parent=5 // pred_check
        _
      $region38: #{tpu_custom_call.1} parent=5 // pred_check_branch
        %202 = sbr.rel (%p199) target = $region40
      $region39: #{tpu_custom_call.1} parent=5 // pred_region
        %s203 = ssub.s32 %s14, 1
        %s204 = sand.u32 %s27, 1
        %s205 = scalar_lea.sflag [#allocation4], %s204
        %s206 = sand.u32 %s27, 1
        %s207 = smul.addr %s206, 64
        %s208 = scalar_lea.vmem [#allocation3], %s207
        // Predicated region
        $region41: #{tpu_custom_call.1} parent=39 // pred_check
          %p209 = pneg %p40
        $region42: #{tpu_custom_call.1} parent=39 // pred_check_branch
          %211 = sbr.rel (%p209) target = $region44
        $region43: #{tpu_custom_call.1} parent=39 // pred_region
          %212 = dma.done %s205, 1024
        $region44: #{tpu_custom_call.1} parent=39 // pred_fallthru
          _
        %s213 = sand.u32 %s27, 1
        %s214 = scalar_lea.sflag [#allocation4], %s213
        %s215 = sand.u32 %s27, 1
        %s216 = smul.addr %s215, 64
        %s217 = scalar_lea.vmem [#allocation3], %s216
        %p218 = pneg %p40
        %p219 = pneg %p37
        %p220 = pneg %p61
        %p221 = pneg %p58
        %p222 = pneg %p82
        %p223 = pneg %p79
        %p224 = pneg %p103
        %p225 = pneg %p100
        %p226 = pneg %p124
        %p227 = pneg %p121
        %p228 = pneg %p145
        %p229 = pneg %p142
        %s230 = smul.u32 8, %s19
        %p231 = scmp.eq.s32.totalorder %s19, 0
        // Predicated region
        $region45: #{tpu_custom_call.1} parent=39 // pred_check
          %p232 = pneg %p231
        $region46: #{tpu_custom_call.1} parent=39 // pred_check_branch
          %234 = sbr.rel (%p232) target = $region48
        $region47: #{tpu_custom_call.1} parent=39 // pred_region
          %vm235 = vcmask 261120
          %236 = vst.msk [vmem:[#allocation2] sm:$0xff] %vm235, 0.0
        $region48: #{tpu_custom_call.1} parent=39 // pred_fallthru
          _
        %v237 = vld [vmem:[%s1] sm:$0xff]
        %v238 = vld [vmem:[%s1 + $0x8] sm:$0xff]
        %v239 = vld [vmem:[%s1 + $0x10] sm:$0xff]
        %v240 = vld [vmem:[%s1 + $0x18] sm:$0xff]
        %v241 = vld [vmem:[%s2] sm:$0x1]
        %v242 = vld [vmem:[#allocation2] sm:$0xff]
        %v243 = vld [vmem:[%s208] sm:$0xff]
        %vm244 = vcmask 261120
        %v246 = vsel %vm244, %v242, 0
        %248 = vmatprep.subr.mxu0 0.0
        %249 = vmatpush1.msra.mxu0 %v237
        %250 = vmatprep.subr.mxu0 0.0
        %251 = vmatpush1.msra.mxu0 %v238
        %252 = vmatprep.subr.mxu0 0.0
        %253 = vmatpush1.msra.mxu0 %v239
        %254 = vmatprep.subr.mxu0 0.0
        %255 = vmatpush1.msra.mxu0 %v240
        %256 = vmatprep.subr.mxu0 0.0
        %257 = vmatpush1.msra.mxu0 0.0
        %258 = vmatprep.subr.mxu0 0.0
        %259 = vmatpush1.msra.mxu0 0.0
        %260 = vmatprep.subr.mxu0 0.0
        %261 = vmatpush1.msra.mxu0 0.0
        %262 = vmatprep.subr.mxu0 0.0
        %263 = vmatpush1.msra.mxu0 0.0
        %264 = vmatprep.subr.mxu0 0.0
        %265 = vmatpush1.msra.mxu0 0.0
        %266 = vmatprep.subr.mxu0 0.0
        %267 = vmatpush1.msra.mxu0 0.0
        %268 = vmatprep.subr.mxu0 0.0
        %269 = vmatpush1.msra.mxu0 0.0
        %270 = vmatprep.subr.mxu0 0.0
        %271 = vmatpush1.msra.mxu0 0.0
        %272 = vmatprep.subr.mxu0 0.0
        %273 = vmatpush1.msra.mxu0 0.0
        %274 = vmatprep.subr.mxu0 0.0
        %275 = vmatpush1.msra.mxu0 0.0
        %276 = vmatprep.subr.mxu0 0.0
        %277 = vmatpush1.msra.mxu0 0.0
        %278 = vmatprep.subr.mxu0 0.0
        %279 = vmatpush1.msra.mxu0 0.0
        %280 = vmatprep.subr.mxu0 0.0
        %281 = vmatpush1.msra.mxu0 0.0
        %282 = vmatprep.subr.mxu0 0.0
        %283 = vmatpush1.msra.mxu0 0.0
        %284 = vmatprep.subr.mxu0 0.0
        %285 = vmatpush1.msra.mxu0 0.0
        %286 = vmatprep.subr.mxu0 0.0
        %287 = vmatpush1.msra.mxu0 0.0
        %288 = vmatprep.subr.mxu0 0.0
        %289 = vmatpush1.msra.mxu0 0.0
        %290 = vmatprep.subr.mxu0 0.0
        %291 = vmatpush1.msra.mxu0 0.0
        %292 = vmatprep.subr.mxu0 0.0
        %293 = vmatpush1.msra.mxu0 0.0
        %294 = vmatprep.subr.mxu0 0.0
        %295 = vmatpush1.msra.mxu0 0.0
        %296 = vmatprep.subr.mxu0 0.0
        %297 = vmatpush1.msra.mxu0 0.0
        %298 = vmatprep.subr.mxu0 0.0
        %299 = vmatpush1.msra.mxu0 0.0
        %300 = vmatprep.subr.mxu0 0.0
        %301 = vmatpush1.msra.mxu0 0.0
        %302 = vmatprep.subr.mxu0 0.0
        %303 = vmatpush1.msra.mxu0 0.0
        %304 = vmatprep.subr.mxu0 0.0
        %305 = vmatpush1.msra.mxu0 0.0
        %306 = vmatprep.subr.mxu0 0.0
        %307 = vmatpush1.msra.mxu0 0.0
        %308 = vmatprep.subr.mxu0 0.0
        %309 = vmatpush1.msra.mxu0 0.0
        %310 = vmatprep.subr.mxu0 0.0
        %311 = vmatpush1.msra.mxu0 0.0
        %312 = vmatprep.mubr.f32.mxu0 0.0
        %313 = vmatmul.mubr.f32.gmra.mrb[0].mxu0 %v246
        %v314 = vpop.f32.mrb[0].mxu0
        %v315 = vadd.f32 0.0, %v314
        %v316 = vpop.f32.mrb[0].mxu0
        %317 = vdwg.mxu0
        %v318 = vadd.f32 %v243, %v315
        %v319 = vxor.u32 %v318, 2147483648
        %v320 = vmul.f32 %v319, 1.442695
        %v321 = vpow.pop %v320
        %v322 = vadd.f32 %v321, 1.0
        %v323 = vrcp.pop %v322
        %v324 = vmul.f32 1.0, %v323
        %v326 = vlaneseq
        %v327 = vshrl.u32 %v326, 7
        %v328 = vsub.s32 0, %v327
        %v329 = vrot.slane %v241, %v328
        %330 = vrot.lane.b32.xlu0 %v329, 64
        %v331 = vpop.permute.xlu0 %330
        %v333 = vadd.f32 %v315, %v331
        %335 = vrot.lane.b32.xlu0 %v333, 64
        %v336 = vpop.permute.xlu0 %335
        %v338 = vmul.f32 %v324, %v336
        %340 = vrot.lane.b32.xlu0 %v338, 64
        %v341 = vpop.permute.xlu0 %340
        %v343 = vadd.f32 %v243, %v341
        %v344 = vtanh.pop %v343
        %346 = vrot.lane.b32.xlu0 %v344, 64
        %v347 = vpop.permute.xlu0 %346
        %v349 = vsub.f32 %v242, %v347
        %351 = vrot.lane.b32.xlu0 %v349, 32
        %v352 = vpop.permute.xlu0 %351
        %v354 = vmul.f32 %v324, %v352
        %356 = vrot.lane.b32.xlu0 %v354, 32
        %v357 = vpop.permute.xlu0 %356
        %v359 = vadd.f32 %v344, %v357
        %s360 = scalar_lea.vmem %s208, 8 [#allocation3]
        %v361 = vld [vmem:[%s360] sm:$0xff]
        %363 = vrot.lane.b32.xlu0 %v359, 64
        %v364 = vpop.permute.xlu0 %363
        %v365 = vsel %vm244, %v364, 0
        %367 = vmatprep.subr.mxu0 0.0
        %368 = vmatpush1.msra.mxu0 %v237
        %369 = vmatprep.subr.mxu0 0.0
        %370 = vmatpush1.msra.mxu0 %v238
        %371 = vmatprep.subr.mxu0 0.0
        %372 = vmatpush1.msra.mxu0 %v239
        %373 = vmatprep.subr.mxu0 0.0
        %374 = vmatpush1.msra.mxu0 %v240
        %375 = vmatprep.subr.mxu0 0.0
        %376 = vmatpush1.msra.mxu0 0.0
        %377 = vmatprep.subr.mxu0 0.0
        %378 = vmatpush1.msra.mxu0 0.0
        %379 = vmatprep.subr.mxu0 0.0
        %380 = vmatpush1.msra.mxu0 0.0
        %381 = vmatprep.subr.mxu0 0.0
        %382 = vmatpush1.msra.mxu0 0.0
        %383 = vmatprep.subr.mxu0 0.0
        %384 = vmatpush1.msra.mxu0 0.0
        %385 = vmatprep.subr.mxu0 0.0
        %386 = vmatpush1.msra.mxu0 0.0
        %387 = vmatprep.subr.mxu0 0.0
        %388 = vmatpush1.msra.mxu0 0.0
        %389 = vmatprep.subr.mxu0 0.0
        %390 = vmatpush1.msra.mxu0 0.0
        %391 = vmatprep.subr.mxu0 0.0
        %392 = vmatpush1.msra.mxu0 0.0
        %393 = vmatprep.subr.mxu0 0.0
        %394 = vmatpush1.msra.mxu0 0.0
        %395 = vmatprep.subr.mxu0 0.0
        %396 = vmatpush1.msra.mxu0 0.0
        %397 = vmatprep.subr.mxu0 0.0
        %398 = vmatpush1.msra.mxu0 0.0
        %399 = vmatprep.subr.mxu0 0.0
        %400 = vmatpush1.msra.mxu0 0.0
        %401 = vmatprep.subr.mxu0 0.0
        %402 = vmatpush1.msra.mxu0 0.0
        %403 = vmatprep.subr.mxu0 0.0
        %404 = vmatpush1.msra.mxu0 0.0
        %405 = vmatprep.subr.mxu0 0.0
        %406 = vmatpush1.msra.mxu0 0.0
        %407 = vmatprep.subr.mxu0 0.0
        %408 = vmatpush1.msra.mxu0 0.0
        %409 = vmatprep.subr.mxu0 0.0
        %410 = vmatpush1.msra.mxu0 0.0
        %411 = vmatprep.subr.mxu0 0.0
        %412 = vmatpush1.msra.mxu0 0.0
        %413 = vmatprep.subr.mxu0 0.0
        %414 = vmatpush1.msra.mxu0 0.0
        %415 = vmatprep.subr.mxu0 0.0
        %416 = vmatpush1.msra.mxu0 0.0
        %417 = vmatprep.subr.mxu0 0.0
        %418 = vmatpush1.msra.mxu0 0.0
        %419 = vmatprep.subr.mxu0 0.0
        %420 = vmatpush1.msra.mxu0 0.0
        %421 = vmatprep.subr.mxu0 0.0
        %422 = vmatpush1.msra.mxu0 0.0
        %423 = vmatprep.subr.mxu0 0.0
        %424 = vmatpush1.msra.mxu0 0.0
        %425 = vmatprep.subr.mxu0 0.0
        %426 = vmatpush1.msra.mxu0 0.0
        %427 = vmatprep.subr.mxu0 0.0
        %428 = vmatpush1.msra.mxu0 0.0
        %429 = vmatprep.subr.mxu0 0.0
        %430 = vmatpush1.msra.mxu0 0.0
        %431 = vmatprep.mubr.f32.mxu0 0.0
        %432 = vmatmul.mubr.f32.gmra.mrb[0].mxu0 %v365
        %v433 = vpop.f32.mrb[0].mxu0
        %v434 = vadd.f32 0.0, %v433
        %v435 = vpop.f32.mrb[0].mxu0
        %436 = vdwg.mxu0
        %v437 = vadd.f32 %v361, %v434
        %v438 = vxor.u32 %v437, 2147483648
        %v439 = vmul.f32 %v438, 1.442695
        %v440 = vpow.pop %v439
        %v441 = vadd.f32 %v440, 1.0
        %v442 = vrcp.pop %v441
        %v443 = vmul.f32 1.0, %v442
        %v444 = vadd.f32 %v434, %v331
        %446 = vrot.lane.b32.xlu0 %v444, 64
        %v447 = vpop.permute.xlu0 %446
        %v449 = vmul.f32 %v443, %v447
        %451 = vrot.lane.b32.xlu0 %v449, 64
        %v452 = vpop.permute.xlu0 %451
        %v454 = vadd.f32 %v361, %v452
        %v455 = vtanh.pop %v454
        %v456 = vsub.f32 %v359, %v455
        %458 = vrot.lane.b32.xlu0 %v456, 96
        %v459 = vpop.permute.xlu0 %458
        %v461 = vmul.f32 %v443, %v459
        %463 = vrot.lane.b32.xlu0 %v461, 32
        %v464 = vpop.permute.xlu0 %463
        %v466 = vadd.f32 %v455, %v464
        %s467 = scalar_lea.vmem %s208, 16 [#allocation3]
        %v468 = vld [vmem:[%s467] sm:$0xff]
        %470 = vrot.lane.b32.xlu0 %v466, 64
        %v471 = vpop.permute.xlu0 %470
        %v472 = vsel %vm244, %v471, 0
        %474 = vmatprep.subr.mxu0 0.0
        %475 = vmatpush1.msra.mxu0 %v237
        %476 = vmatprep.subr.mxu0 0.0
        %477 = vmatpush1.msra.mxu0 %v238
        %478 = vmatprep.subr.mxu0 0.0
        %479 = vmatpush1.msra.mxu0 %v239
        %480 = vmatprep.subr.mxu0 0.0
        %481 = vmatpush1.msra.mxu0 %v240
        %482 = vmatprep.subr.mxu0 0.0
        %483 = vmatpush1.msra.mxu0 0.0
        %484 = vmatprep.subr.mxu0 0.0
        %485 = vmatpush1.msra.mxu0 0.0
        %486 = vmatprep.subr.mxu0 0.0
        %487 = vmatpush1.msra.mxu0 0.0
        %488 = vmatprep.subr.mxu0 0.0
        %489 = vmatpush1.msra.mxu0 0.0
        %490 = vmatprep.subr.mxu0 0.0
        %491 = vmatpush1.msra.mxu0 0.0
        %492 = vmatprep.subr.mxu0 0.0
        %493 = vmatpush1.msra.mxu0 0.0
        %494 = vmatprep.subr.mxu0 0.0
        %495 = vmatpush1.msra.mxu0 0.0
        %496 = vmatprep.subr.mxu0 0.0
        %497 = vmatpush1.msra.mxu0 0.0
        %498 = vmatprep.subr.mxu0 0.0
        %499 = vmatpush1.msra.mxu0 0.0
        %500 = vmatprep.subr.mxu0 0.0
        %501 = vmatpush1.msra.mxu0 0.0
        %502 = vmatprep.subr.mxu0 0.0
        %503 = vmatpush1.msra.mxu0 0.0
        %504 = vmatprep.subr.mxu0 0.0
        %505 = vmatpush1.msra.mxu0 0.0
        %506 = vmatprep.subr.mxu0 0.0
        %507 = vmatpush1.msra.mxu0 0.0
        %508 = vmatprep.subr.mxu0 0.0
        %509 = vmatpush1.msra.mxu0 0.0
        %510 = vmatprep.subr.mxu0 0.0
        %511 = vmatpush1.msra.mxu0 0.0
        %512 = vmatprep.subr.mxu0 0.0
        %513 = vmatpush1.msra.mxu0 0.0
        %514 = vmatprep.subr.mxu0 0.0
        %515 = vmatpush1.msra.mxu0 0.0
        %516 = vmatprep.subr.mxu0 0.0
        %517 = vmatpush1.msra.mxu0 0.0
        %518 = vmatprep.subr.mxu0 0.0
        %519 = vmatpush1.msra.mxu0 0.0
        %520 = vmatprep.subr.mxu0 0.0
        %521 = vmatpush1.msra.mxu0 0.0
        %522 = vmatprep.subr.mxu0 0.0
        %523 = vmatpush1.msra.mxu0 0.0
        %524 = vmatprep.subr.mxu0 0.0
        %525 = vmatpush1.msra.mxu0 0.0
        %526 = vmatprep.subr.mxu0 0.0
        %527 = vmatpush1.msra.mxu0 0.0
        %528 = vmatprep.subr.mxu0 0.0
        %529 = vmatpush1.msra.mxu0 0.0
        %530 = vmatprep.subr.mxu0 0.0
        %531 = vmatpush1.msra.mxu0 0.0
        %532 = vmatprep.subr.mxu0 0.0
        %533 = vmatpush1.msra.mxu0 0.0
        %534 = vmatprep.subr.mxu0 0.0
        %535 = vmatpush1.msra.mxu0 0.0
        %536 = vmatprep.subr.mxu0 0.0
        %537 = vmatpush1.msra.mxu0 0.0
        %538 = vmatprep.mubr.f32.mxu0 0.0
        %539 = vmatmul.mubr.f32.gmra.mrb[0].mxu0 %v472
        %v540 = vpop.f32.mrb[0].mxu0
        %v541 = vadd.f32 0.0, %v540
        %v542 = vpop.f32.mrb[0].mxu0
        %543 = vdwg.mxu0
        %v544 = vadd.f32 %v468, %v541
        %v545 = vxor.u32 %v544, 2147483648
        %v546 = vmul.f32 %v545, 1.442695
        %v547 = vpow.pop %v546
        %v548 = vadd.f32 %v547, 1.0
        %v549 = vrcp.pop %v548
        %v550 = vmul.f32 1.0, %v549
        %v551 = vadd.f32 %v541, %v331
        %553 = vrot.lane.b32.xlu0 %v551, 64
        %v554 = vpop.permute.xlu0 %553
        %v556 = vmul.f32 %v550, %v554
        %558 = vrot.lane.b32.xlu0 %v556, 64
        %v559 = vpop.permute.xlu0 %558
        %v561 = vadd.f32 %v468, %v559
        %v562 = vtanh.pop %v561
        %v563 = vsub.f32 %v466, %v562
        %565 = vrot.lane.b32.xlu0 %v563, 96
        %v566 = vpop.permute.xlu0 %565
        %v568 = vmul.f32 %v550, %v566
        %570 = vrot.lane.b32.xlu0 %v568, 32
        %v571 = vpop.permute.xlu0 %570
        %v573 = vadd.f32 %v562, %v571
        %s574 = scalar_lea.vmem %s208, 24 [#allocation3]
        %v575 = vld [vmem:[%s574] sm:$0xff]
        %577 = vrot.lane.b32.xlu0 %v573, 64
        %v578 = vpop.permute.xlu0 %577
        %v579 = vsel %vm244, %v578, 0
        %581 = vmatprep.subr.mxu0 0.0
        %582 = vmatpush1.msra.mxu0 %v237
        %583 = vmatprep.subr.mxu0 0.0
        %584 = vmatpush1.msra.mxu0 %v238
        %585 = vmatprep.subr.mxu0 0.0
        %586 = vmatpush1.msra.mxu0 %v239
        %587 = vmatprep.subr.mxu0 0.0
        %588 = vmatpush1.msra.mxu0 %v240
        %589 = vmatprep.subr.mxu0 0.0
        %590 = vmatpush1.msra.mxu0 0.0
        %591 = vmatprep.subr.mxu0 0.0
        %592 = vmatpush1.msra.mxu0 0.0
        %593 = vmatprep.subr.mxu0 0.0
        %594 = vmatpush1.msra.mxu0 0.0
        %595 = vmatprep.subr.mxu0 0.0
        %596 = vmatpush1.msra.mxu0 0.0
        %597 = vmatprep.subr.mxu0 0.0
        %598 = vmatpush1.msra.mxu0 0.0
        %599 = vmatprep.subr.mxu0 0.0
        %600 = vmatpush1.msra.mxu0 0.0
        %601 = vmatprep.subr.mxu0 0.0
        %602 = vmatpush1.msra.mxu0 0.0
        %603 = vmatprep.subr.mxu0 0.0
        %604 = vmatpush1.msra.mxu0 0.0
        %605 = vmatprep.subr.mxu0 0.0
        %606 = vmatpush1.msra.mxu0 0.0
        %607 = vmatprep.subr.mxu0 0.0
        %608 = vmatpush1.msra.mxu0 0.0
        %609 = vmatprep.subr.mxu0 0.0
        %610 = vmatpush1.msra.mxu0 0.0
        %611 = vmatprep.subr.mxu0 0.0
        %612 = vmatpush1.msra.mxu0 0.0
        %613 = vmatprep.subr.mxu0 0.0
        %614 = vmatpush1.msra.mxu0 0.0
        %615 = vmatprep.subr.mxu0 0.0
        %616 = vmatpush1.msra.mxu0 0.0
        %617 = vmatprep.subr.mxu0 0.0
        %618 = vmatpush1.msra.mxu0 0.0
        %619 = vmatprep.subr.mxu0 0.0
        %620 = vmatpush1.msra.mxu0 0.0
        %621 = vmatprep.subr.mxu0 0.0
        %622 = vmatpush1.msra.mxu0 0.0
        %623 = vmatprep.subr.mxu0 0.0
        %624 = vmatpush1.msra.mxu0 0.0
        %625 = vmatprep.subr.mxu0 0.0
        %626 = vmatpush1.msra.mxu0 0.0
        %627 = vmatprep.subr.mxu0 0.0
        %628 = vmatpush1.msra.mxu0 0.0
        %629 = vmatprep.subr.mxu0 0.0
        %630 = vmatpush1.msra.mxu0 0.0
        %631 = vmatprep.subr.mxu0 0.0
        %632 = vmatpush1.msra.mxu0 0.0
        %633 = vmatprep.subr.mxu0 0.0
        %634 = vmatpush1.msra.mxu0 0.0
        %635 = vmatprep.subr.mxu0 0.0
        %636 = vmatpush1.msra.mxu0 0.0
        %637 = vmatprep.subr.mxu0 0.0
        %638 = vmatpush1.msra.mxu0 0.0
        %639 = vmatprep.subr.mxu0 0.0
        %640 = vmatpush1.msra.mxu0 0.0
        %641 = vmatprep.subr.mxu0 0.0
        %642 = vmatpush1.msra.mxu0 0.0
        %643 = vmatprep.subr.mxu0 0.0
        %644 = vmatpush1.msra.mxu0 0.0
        %645 = vmatprep.mubr.f32.mxu0 0.0
        %646 = vmatmul.mubr.f32.gmra.mrb[0].mxu0 %v579
        %v647 = vpop.f32.mrb[0].mxu0
        %v648 = vadd.f32 0.0, %v647
        %v649 = vpop.f32.mrb[0].mxu0
        %650 = vdwg.mxu0
        %v651 = vadd.f32 %v575, %v648
        %v652 = vxor.u32 %v651, 2147483648
        %v653 = vmul.f32 %v652, 1.442695
        %v654 = vpow.pop %v653
        %v655 = vadd.f32 %v654, 1.0
        %v656 = vrcp.pop %v655
        %v657 = vmul.f32 1.0, %v656
        %v658 = vadd.f32 %v648, %v331
        %660 = vrot.lane.b32.xlu0 %v658, 64
        %v661 = vpop.permute.xlu0 %660
        %v663 = vmul.f32 %v657, %v661
        %665 = vrot.lane.b32.xlu0 %v663, 64
        %v666 = vpop.permute.xlu0 %665
        %v668 = vadd.f32 %v575, %v666
        %v669 = vtanh.pop %v668
        %v670 = vsub.f32 %v573, %v669
        %672 = vrot.lane.b32.xlu0 %v670, 96
        %v673 = vpop.permute.xlu0 %672
        %v675 = vmul.f32 %v657, %v673
        %677 = vrot.lane.b32.xlu0 %v675, 32
        %v678 = vpop.permute.xlu0 %677
        %v680 = vadd.f32 %v669, %v678
        %s681 = scalar_lea.vmem %s208, 32 [#allocation3]
        %v682 = vld [vmem:[%s681] sm:$0xff]
        %684 = vrot.lane.b32.xlu0 %v680, 64
        %v685 = vpop.permute.xlu0 %684
        %v686 = vsel %vm244, %v685, 0
        %688 = vmatprep.subr.mxu0 0.0
        %689 = vmatpush1.msra.mxu0 %v237
        %690 = vmatprep.subr.mxu0 0.0
        %691 = vmatpush1.msra.mxu0 %v238
        %692 = vmatprep.subr.mxu0 0.0
        %693 = vmatpush1.msra.mxu0 %v239
        %694 = vmatprep.subr.mxu0 0.0
        %695 = vmatpush1.msra.mxu0 %v240
        %696 = vmatprep.subr.mxu0 0.0
        %697 = vmatpush1.msra.mxu0 0.0
        %698 = vmatprep.subr.mxu0 0.0
        %699 = vmatpush1.msra.mxu0 0.0
        %700 = vmatprep.subr.mxu0 0.0
        %701 = vmatpush1.msra.mxu0 0.0
        %702 = vmatprep.subr.mxu0 0.0
        %703 = vmatpush1.msra.mxu0 0.0
        %704 = vmatprep.subr.mxu0 0.0
        %705 = vmatpush1.msra.mxu0 0.0
        %706 = vmatprep.subr.mxu0 0.0
        %707 = vmatpush1.msra.mxu0 0.0
        %708 = vmatprep.subr.mxu0 0.0
        %709 = vmatpush1.msra.mxu0 0.0
        %710 = vmatprep.subr.mxu0 0.0
        %711 = vmatpush1.msra.mxu0 0.0
        %712 = vmatprep.subr.mxu0 0.0
        %713 = vmatpush1.msra.mxu0 0.0
        %714 = vmatprep.subr.mxu0 0.0
        %715 = vmatpush1.msra.mxu0 0.0
        %716 = vmatprep.subr.mxu0 0.0
        %717 = vmatpush1.msra.mxu0 0.0
        %718 = vmatprep.subr.mxu0 0.0
        %719 = vmatpush1.msra.mxu0 0.0
        %720 = vmatprep.subr.mxu0 0.0
        %721 = vmatpush1.msra.mxu0 0.0
        %722 = vmatprep.subr.mxu0 0.0
        %723 = vmatpush1.msra.mxu0 0.0
        %724 = vmatprep.subr.mxu0 0.0
        %725 = vmatpush1.msra.mxu0 0.0
        %726 = vmatprep.subr.mxu0 0.0
        %727 = vmatpush1.msra.mxu0 0.0
        %728 = vmatprep.subr.mxu0 0.0
        %729 = vmatpush1.msra.mxu0 0.0
        %730 = vmatprep.subr.mxu0 0.0
        %731 = vmatpush1.msra.mxu0 0.0
        %732 = vmatprep.subr.mxu0 0.0
        %733 = vmatpush1.msra.mxu0 0.0
        %734 = vmatprep.subr.mxu0 0.0
        %735 = vmatpush1.msra.mxu0 0.0
        %736 = vmatprep.subr.mxu0 0.0
        %737 = vmatpush1.msra.mxu0 0.0
        %738 = vmatprep.subr.mxu0 0.0
        %739 = vmatpush1.msra.mxu0 0.0
        %740 = vmatprep.subr.mxu0 0.0
        %741 = vmatpush1.msra.mxu0 0.0
        %742 = vmatprep.subr.mxu0 0.0
        %743 = vmatpush1.msra.mxu0 0.0
        %744 = vmatprep.subr.mxu0 0.0
        %745 = vmatpush1.msra.mxu0 0.0
        %746 = vmatprep.subr.mxu0 0.0
        %747 = vmatpush1.msra.mxu0 0.0
        %748 = vmatprep.subr.mxu0 0.0
        %749 = vmatpush1.msra.mxu0 0.0
        %750 = vmatprep.subr.mxu0 0.0
        %751 = vmatpush1.msra.mxu0 0.0
        %752 = vmatprep.mubr.f32.mxu0 0.0
        %753 = vmatmul.mubr.f32.gmra.mrb[0].mxu0 %v686
        %v754 = vpop.f32.mrb[0].mxu0
        %v755 = vadd.f32 0.0, %v754
        %v756 = vpop.f32.mrb[0].mxu0
        %757 = vdwg.mxu0
        %v758 = vadd.f32 %v682, %v755
        %v759 = vxor.u32 %v758, 2147483648
        %v760 = vmul.f32 %v759, 1.442695
        %v761 = vpow.pop %v760
        %v762 = vadd.f32 %v761, 1.0
        %v763 = vrcp.pop %v762
        %v764 = vmul.f32 1.0, %v763
        %v765 = vadd.f32 %v755, %v331
        %767 = vrot.lane.b32.xlu0 %v765, 64
        %v768 = vpop.permute.xlu0 %767
        %v770 = vmul.f32 %v764, %v768
        %772 = vrot.lane.b32.xlu0 %v770, 64
        %v773 = vpop.permute.xlu0 %772
        %v775 = vadd.f32 %v682, %v773
        %v776 = vtanh.pop %v775
        %v777 = vsub.f32 %v680, %v776
        %779 = vrot.lane.b32.xlu0 %v777, 96
        %v780 = vpop.permute.xlu0 %779
        %v782 = vmul.f32 %v764, %v780
        %784 = vrot.lane.b32.xlu0 %v782, 32
        %v785 = vpop.permute.xlu0 %784
        %v787 = vadd.f32 %v776, %v785
        %s788 = scalar_lea.vmem %s208, 40 [#allocation3]
        %v789 = vld [vmem:[%s788] sm:$0xff]
        %791 = vrot.lane.b32.xlu0 %v787, 64
        %v792 = vpop.permute.xlu0 %791
        %v793 = vsel %vm244, %v792, 0
        %795 = vmatprep.subr.mxu0 0.0
        %796 = vmatpush1.msra.mxu0 %v237
        %797 = vmatprep.subr.mxu0 0.0
        %798 = vmatpush1.msra.mxu0 %v238
        %799 = vmatprep.subr.mxu0 0.0
        %800 = vmatpush1.msra.mxu0 %v239
        %801 = vmatprep.subr.mxu0 0.0
        %802 = vmatpush1.msra.mxu0 %v240
        %803 = vmatprep.subr.mxu0 0.0
        %804 = vmatpush1.msra.mxu0 0.0
        %805 = vmatprep.subr.mxu0 0.0
        %806 = vmatpush1.msra.mxu0 0.0
        %807 = vmatprep.subr.mxu0 0.0
        %808 = vmatpush1.msra.mxu0 0.0
        %809 = vmatprep.subr.mxu0 0.0
        %810 = vmatpush1.msra.mxu0 0.0
        %811 = vmatprep.subr.mxu0 0.0
        %812 = vmatpush1.msra.mxu0 0.0
        %813 = vmatprep.subr.mxu0 0.0
        %814 = vmatpush1.msra.mxu0 0.0
        %815 = vmatprep.subr.mxu0 0.0
        %816 = vmatpush1.msra.mxu0 0.0
        %817 = vmatprep.subr.mxu0 0.0
        %818 = vmatpush1.msra.mxu0 0.0
        %819 = vmatprep.subr.mxu0 0.0
        %820 = vmatpush1.msra.mxu0 0.0
        %821 = vmatprep.subr.mxu0 0.0
        %822 = vmatpush1.msra.mxu0 0.0
        %823 = vmatprep.subr.mxu0 0.0
        %824 = vmatpush1.msra.mxu0 0.0
        %825 = vmatprep.subr.mxu0 0.0
        %826 = vmatpush1.msra.mxu0 0.0
        %827 = vmatprep.subr.mxu0 0.0
        %828 = vmatpush1.msra.mxu0 0.0
        %829 = vmatprep.subr.mxu0 0.0
        %830 = vmatpush1.msra.mxu0 0.0
        %831 = vmatprep.subr.mxu0 0.0
        %832 = vmatpush1.msra.mxu0 0.0
        %833 = vmatprep.subr.mxu0 0.0
        %834 = vmatpush1.msra.mxu0 0.0
        %835 = vmatprep.subr.mxu0 0.0
        %836 = vmatpush1.msra.mxu0 0.0
        %837 = vmatprep.subr.mxu0 0.0
        %838 = vmatpush1.msra.mxu0 0.0
        %839 = vmatprep.subr.mxu0 0.0
        %840 = vmatpush1.msra.mxu0 0.0
        %841 = vmatprep.subr.mxu0 0.0
        %842 = vmatpush1.msra.mxu0 0.0
        %843 = vmatprep.subr.mxu0 0.0
        %844 = vmatpush1.msra.mxu0 0.0
        %845 = vmatprep.subr.mxu0 0.0
        %846 = vmatpush1.msra.mxu0 0.0
        %847 = vmatprep.subr.mxu0 0.0
        %848 = vmatpush1.msra.mxu0 0.0
        %849 = vmatprep.subr.mxu0 0.0
        %850 = vmatpush1.msra.mxu0 0.0
        %851 = vmatprep.subr.mxu0 0.0
        %852 = vmatpush1.msra.mxu0 0.0
        %853 = vmatprep.subr.mxu0 0.0
        %854 = vmatpush1.msra.mxu0 0.0
        %855 = vmatprep.subr.mxu0 0.0
        %856 = vmatpush1.msra.mxu0 0.0
        %857 = vmatprep.subr.mxu0 0.0
        %858 = vmatpush1.msra.mxu0 0.0
        %859 = vmatprep.mubr.f32.mxu0 0.0
        %860 = vmatmul.mubr.f32.gmra.mrb[0].mxu0 %v793
        %v861 = vpop.f32.mrb[0].mxu0
        %v862 = vadd.f32 0.0, %v861
        %v863 = vpop.f32.mrb[0].mxu0
        %864 = vdwg.mxu0
        %v865 = vadd.f32 %v789, %v862
        %v866 = vxor.u32 %v865, 2147483648
        %v867 = vmul.f32 %v866, 1.442695
        %v868 = vpow.pop %v867
        %v869 = vadd.f32 %v868, 1.0
        %v870 = vrcp.pop %v869
        %v871 = vmul.f32 1.0, %v870
        %v872 = vadd.f32 %v862, %v331
        %874 = vrot.lane.b32.xlu0 %v872, 64
        %v875 = vpop.permute.xlu0 %874
        %v877 = vmul.f32 %v871, %v875
        %879 = vrot.lane.b32.xlu0 %v877, 64
        %v880 = vpop.permute.xlu0 %879
        %v882 = vadd.f32 %v789, %v880
        %v883 = vtanh.pop %v882
        %v884 = vsub.f32 %v787, %v883
        %886 = vrot.lane.b32.xlu0 %v884, 96
        %v887 = vpop.permute.xlu0 %886
        %v889 = vmul.f32 %v871, %v887
        %891 = vrot.lane.b32.xlu0 %v889, 32
        %v892 = vpop.permute.xlu0 %891
        %v894 = vadd.f32 %v883, %v892
        %s895 = scalar_lea.vmem %s208, 48 [#allocation3]
        %v896 = vld [vmem:[%s895] sm:$0xff]
        %898 = vrot.lane.b32.xlu0 %v894, 64
        %v899 = vpop.permute.xlu0 %898
        %v900 = vsel %vm244, %v899, 0
        %902 = vmatprep.subr.mxu0 0.0
        %903 = vmatpush1.msra.mxu0 %v237
        %904 = vmatprep.subr.mxu0 0.0
        %905 = vmatpush1.msra.mxu0 %v238
        %906 = vmatprep.subr.mxu0 0.0
        %907 = vmatpush1.msra.mxu0 %v239
        %908 = vmatprep.subr.mxu0 0.0
        %909 = vmatpush1.msra.mxu0 %v240
        %910 = vmatprep.subr.mxu0 0.0
        %911 = vmatpush1.msra.mxu0 0.0
        %912 = vmatprep.subr.mxu0 0.0
        %913 = vmatpush1.msra.mxu0 0.0
        %914 = vmatprep.subr.mxu0 0.0
        %915 = vmatpush1.msra.mxu0 0.0
        %916 = vmatprep.subr.mxu0 0.0
        %917 = vmatpush1.msra.mxu0 0.0
        %918 = vmatprep.subr.mxu0 0.0
        %919 = vmatpush1.msra.mxu0 0.0
        %920 = vmatprep.subr.mxu0 0.0
        %921 = vmatpush1.msra.mxu0 0.0
        %922 = vmatprep.subr.mxu0 0.0
        %923 = vmatpush1.msra.mxu0 0.0
        %924 = vmatprep.subr.mxu0 0.0
        %925 = vmatpush1.msra.mxu0 0.0
        %926 = vmatprep.subr.mxu0 0.0
        %927 = vmatpush1.msra.mxu0 0.0
        %928 = vmatprep.subr.mxu0 0.0
        %929 = vmatpush1.msra.mxu0 0.0
        %930 = vmatprep.subr.mxu0 0.0
        %931 = vmatpush1.msra.mxu0 0.0
        %932 = vmatprep.subr.mxu0 0.0
        %933 = vmatpush1.msra.mxu0 0.0
        %934 = vmatprep.subr.mxu0 0.0
        %935 = vmatpush1.msra.mxu0 0.0
        %936 = vmatprep.subr.mxu0 0.0
        %937 = vmatpush1.msra.mxu0 0.0
        %938 = vmatprep.subr.mxu0 0.0
        %939 = vmatpush1.msra.mxu0 0.0
        %940 = vmatprep.subr.mxu0 0.0
        %941 = vmatpush1.msra.mxu0 0.0
        %942 = vmatprep.subr.mxu0 0.0
        %943 = vmatpush1.msra.mxu0 0.0
        %944 = vmatprep.subr.mxu0 0.0
        %945 = vmatpush1.msra.mxu0 0.0
        %946 = vmatprep.subr.mxu0 0.0
        %947 = vmatpush1.msra.mxu0 0.0
        %948 = vmatprep.subr.mxu0 0.0
        %949 = vmatpush1.msra.mxu0 0.0
        %950 = vmatprep.subr.mxu0 0.0
        %951 = vmatpush1.msra.mxu0 0.0
        %952 = vmatprep.subr.mxu0 0.0
        %953 = vmatpush1.msra.mxu0 0.0
        %954 = vmatprep.subr.mxu0 0.0
        %955 = vmatpush1.msra.mxu0 0.0
        %956 = vmatprep.subr.mxu0 0.0
        %957 = vmatpush1.msra.mxu0 0.0
        %958 = vmatprep.subr.mxu0 0.0
        %959 = vmatpush1.msra.mxu0 0.0
        %960 = vmatprep.subr.mxu0 0.0
        %961 = vmatpush1.msra.mxu0 0.0
        %962 = vmatprep.subr.mxu0 0.0
        %963 = vmatpush1.msra.mxu0 0.0
        %964 = vmatprep.subr.mxu0 0.0
        %965 = vmatpush1.msra.mxu0 0.0
        %966 = vmatprep.mubr.f32.mxu0 0.0
        %967 = vmatmul.mubr.f32.gmra.mrb[0].mxu0 %v900
        %v968 = vpop.f32.mrb[0].mxu0
        %v969 = vadd.f32 0.0, %v968
        %v970 = vpop.f32.mrb[0].mxu0
        %971 = vdwg.mxu0
        %v972 = vadd.f32 %v896, %v969
        %v973 = vxor.u32 %v972, 2147483648
        %v974 = vmul.f32 %v973, 1.442695
        %v975 = vpow.pop %v974
        %v976 = vadd.f32 %v975, 1.0
        %v977 = vrcp.pop %v976
        %v978 = vmul.f32 1.0, %v977
        %v979 = vadd.f32 %v969, %v331
        %981 = vrot.lane.b32.xlu0 %v979, 64
        %v982 = vpop.permute.xlu0 %981
        %v984 = vmul.f32 %v978, %v982
        %986 = vrot.lane.b32.xlu0 %v984, 64
        %v987 = vpop.permute.xlu0 %986
        %v989 = vadd.f32 %v896, %v987
        %v990 = vtanh.pop %v989
        %v991 = vsub.f32 %v894, %v990
        %993 = vrot.lane.b32.xlu0 %v991, 96
        %v994 = vpop.permute.xlu0 %993
        %v996 = vmul.f32 %v978, %v994
        %998 = vrot.lane.b32.xlu0 %v996, 32
        %v999 = vpop.permute.xlu0 %998
        %v1001 = vadd.f32 %v990, %v999
        %s1002 = scalar_lea.vmem %s208, 56 [#allocation3]
        %v1003 = vld [vmem:[%s1002] sm:$0xff]
        %1005 = vrot.lane.b32.xlu0 %v1001, 64
        %v1006 = vpop.permute.xlu0 %1005
        %v1007 = vsel %vm244, %v1006, 0
        %1009 = vmatprep.subr.mxu0 0.0
        %1010 = vmatpush1.msra.mxu0 %v237
        %1011 = vmatprep.subr.mxu0 0.0
        %1012 = vmatpush1.msra.mxu0 %v238
        %1013 = vmatprep.subr.mxu0 0.0
        %1014 = vmatpush1.msra.mxu0 %v239
        %1015 = vmatprep.subr.mxu0 0.0
        %1016 = vmatpush1.msra.mxu0 %v240
        %1017 = vmatprep.subr.mxu0 0.0
        %1018 = vmatpush1.msra.mxu0 0.0
        %1019 = vmatprep.subr.mxu0 0.0
        %1020 = vmatpush1.msra.mxu0 0.0
        %1021 = vmatprep.subr.mxu0 0.0
        %1022 = vmatpush1.msra.mxu0 0.0
        %1023 = vmatprep.subr.mxu0 0.0
        %1024 = vmatpush1.msra.mxu0 0.0
        %1025 = vmatprep.subr.mxu0 0.0
        %1026 = vmatpush1.msra.mxu0 0.0
        %1027 = vmatprep.subr.mxu0 0.0
        %1028 = vmatpush1.msra.mxu0 0.0
        %1029 = vmatprep.subr.mxu0 0.0
        %1030 = vmatpush1.msra.mxu0 0.0
        %1031 = vmatprep.subr.mxu0 0.0
        %1032 = vmatpush1.msra.mxu0 0.0
        %1033 = vmatprep.subr.mxu0 0.0
        %1034 = vmatpush1.msra.mxu0 0.0
        %1035 = vmatprep.subr.mxu0 0.0
        %1036 = vmatpush1.msra.mxu0 0.0
        %1037 = vmatprep.subr.mxu0 0.0
        %1038 = vmatpush1.msra.mxu0 0.0
        %1039 = vmatprep.subr.mxu0 0.0
        %1040 = vmatpush1.msra.mxu0 0.0
        %1041 = vmatprep.subr.mxu0 0.0
        %1042 = vmatpush1.msra.mxu0 0.0
        %1043 = vmatprep.subr.mxu0 0.0
        %1044 = vmatpush1.msra.mxu0 0.0
        %1045 = vmatprep.subr.mxu0 0.0
        %1046 = vmatpush1.msra.mxu0 0.0
        %1047 = vmatprep.subr.mxu0 0.0
        %1048 = vmatpush1.msra.mxu0 0.0
        %1049 = vmatprep.subr.mxu0 0.0
        %1050 = vmatpush1.msra.mxu0 0.0
        %1051 = vmatprep.subr.mxu0 0.0
        %1052 = vmatpush1.msra.mxu0 0.0
        %1053 = vmatprep.subr.mxu0 0.0
        %1054 = vmatpush1.msra.mxu0 0.0
        %1055 = vmatprep.subr.mxu0 0.0
        %1056 = vmatpush1.msra.mxu0 0.0
        %1057 = vmatprep.subr.mxu0 0.0
        %1058 = vmatpush1.msra.mxu0 0.0
        %1059 = vmatprep.subr.mxu0 0.0
        %1060 = vmatpush1.msra.mxu0 0.0
        %1061 = vmatprep.subr.mxu0 0.0
        %1062 = vmatpush1.msra.mxu0 0.0
        %1063 = vmatprep.subr.mxu0 0.0
        %1064 = vmatpush1.msra.mxu0 0.0
        %1065 = vmatprep.subr.mxu0 0.0
        %1066 = vmatpush1.msra.mxu0 0.0
        %1067 = vmatprep.subr.mxu0 0.0
        %1068 = vmatpush1.msra.mxu0 0.0
        %1069 = vmatprep.subr.mxu0 0.0
        %1070 = vmatpush1.msra.mxu0 0.0
        %1071 = vmatprep.subr.mxu0 0.0
        %1072 = vmatpush1.msra.mxu0 0.0
        %1073 = vmatprep.mubr.f32.mxu0 0.0
        %1074 = vmatmul.mubr.f32.gmra.mrb[0].mxu0 %v1007
        %v1075 = vpop.f32.mrb[0].mxu0
        %v1076 = vadd.f32 0.0, %v1075
        %v1077 = vpop.f32.mrb[0].mxu0
        %1078 = vdwg.mxu0
        %v1079 = vadd.f32 %v1003, %v1076
        %v1080 = vxor.u32 %v1079, 2147483648
        %v1081 = vmul.f32 %v1080, 1.442695
        %v1082 = vpow.pop %v1081
        %v1083 = vadd.f32 %v1082, 1.0
        %v1084 = vrcp.pop %v1083
        %v1085 = vmul.f32 1.0, %v1084
        %v1086 = vadd.f32 %v1076, %v331
        %1088 = vrot.lane.b32.xlu0 %v1086, 64
        %v1089 = vpop.permute.xlu0 %1088
        %v1091 = vmul.f32 %v1085, %v1089
        %1093 = vrot.lane.b32.xlu0 %v1091, 64
        %v1094 = vpop.permute.xlu0 %1093
        %v1096 = vadd.f32 %v1003, %v1094
        %v1097 = vtanh.pop %v1096
        %v1098 = vsub.f32 %v1001, %v1097
        %1100 = vrot.lane.b32.xlu0 %v1098, 96
        %v1101 = vpop.permute.xlu0 %1100
        %v1103 = vmul.f32 %v1085, %v1101
        %1105 = vrot.lane.b32.xlu0 %v1103, 32
        %v1106 = vpop.permute.xlu0 %1105
        %v1108 = vadd.f32 %v1097, %v1106
        %1110 = vrot.lane.b32.xlu0 %v1108, 64
        %v1111 = vpop.permute.xlu0 %1110
        %1113 = vst.msk [vmem:[#allocation2] sm:$0xff] %vm244, %v1111
        %p1114 = scmp.eq.s32.totalorder %s19, 1
        // Predicated region
        $region49: #{tpu_custom_call.1} parent=39 // pred_check
          %p1115 = pneg %p1114
        $region50: #{tpu_custom_call.1} parent=39 // pred_check_branch
          %1117 = sbr.rel (%p1115) target = $region52
        $region51: #{tpu_custom_call.1} parent=39 // pred_region
          %v1118 = vld [vmem:[%s3] sm:$0xff]
          %v1119 = vld [vmem:[%s3 + $0x8] sm:$0xff]
          %v1120 = vld [vmem:[%s3 + $0x10] sm:$0xff]
          %v1121 = vld [vmem:[%s3 + $0x18] sm:$0xff]
          %v1122 = vld [vmem:[%s4] sm:$0x1]
          %v1124 = vlaneseq
          %v1125 = vshrl.u32 %v1124, 7
          %v1126 = vsub.s32 0, %v1125
          %v1127 = vrot.slane %v1122, %v1126
          %v1129 = vsel %vm244, %v1111, 0
          %1131 = vmatprep.subr.mxu0 0.0
          %1132 = vmatpush1.msra.mxu0 %v1118
          %1133 = vmatprep.subr.mxu0 0.0
          %1134 = vmatpush1.msra.mxu0 %v1119
          %1135 = vmatprep.subr.mxu0 0.0
          %1136 = vmatpush1.msra.mxu0 %v1120
          %1137 = vmatprep.subr.mxu0 0.0
          %1138 = vmatpush1.msra.mxu0 %v1121
          %1139 = vmatprep.subr.mxu0 0.0
          %1140 = vmatpush1.msra.mxu0 0.0
          %1141 = vmatprep.subr.mxu0 0.0
          %1142 = vmatpush1.msra.mxu0 0.0
          %1143 = vmatprep.subr.mxu0 0.0
          %1144 = vmatpush1.msra.mxu0 0.0
          %1145 = vmatprep.subr.mxu0 0.0
          %1146 = vmatpush1.msra.mxu0 0.0
          %1147 = vmatprep.subr.mxu0 0.0
          %1148 = vmatpush1.msra.mxu0 0.0
          %1149 = vmatprep.subr.mxu0 0.0
          %1150 = vmatpush1.msra.mxu0 0.0
          %1151 = vmatprep.subr.mxu0 0.0
          %1152 = vmatpush1.msra.mxu0 0.0
          %1153 = vmatprep.subr.mxu0 0.0
          %1154 = vmatpush1.msra.mxu0 0.0
          %1155 = vmatprep.subr.mxu0 0.0
          %1156 = vmatpush1.msra.mxu0 0.0
          %1157 = vmatprep.subr.mxu0 0.0
          %1158 = vmatpush1.msra.mxu0 0.0
          %1159 = vmatprep.subr.mxu0 0.0
          %1160 = vmatpush1.msra.mxu0 0.0
          %1161 = vmatprep.subr.mxu0 0.0
          %1162 = vmatpush1.msra.mxu0 0.0
          %1163 = vmatprep.subr.mxu0 0.0
          %1164 = vmatpush1.msra.mxu0 0.0
          %1165 = vmatprep.subr.mxu0 0.0
          %1166 = vmatpush1.msra.mxu0 0.0
          %1167 = vmatprep.subr.mxu0 0.0
          %1168 = vmatpush1.msra.mxu0 0.0
          %1169 = vmatprep.subr.mxu0 0.0
          %1170 = vmatpush1.msra.mxu0 0.0
          %1171 = vmatprep.subr.mxu0 0.0
          %1172 = vmatpush1.msra.mxu0 0.0
          %1173 = vmatprep.subr.mxu0 0.0
          %1174 = vmatpush1.msra.mxu0 0.0
          %1175 = vmatprep.subr.mxu0 0.0
          %1176 = vmatpush1.msra.mxu0 0.0
          %1177 = vmatprep.subr.mxu0 0.0
          %1178 = vmatpush1.msra.mxu0 0.0
          %1179 = vmatprep.subr.mxu0 0.0
          %1180 = vmatpush1.msra.mxu0 0.0
          %1181 = vmatprep.subr.mxu0 0.0
          %1182 = vmatpush1.msra.mxu0 0.0
          %1183 = vmatprep.subr.mxu0 0.0
          %1184 = vmatpush1.msra.mxu0 0.0
          %1185 = vmatprep.subr.mxu0 0.0
          %1186 = vmatpush1.msra.mxu0 0.0
          %1187 = vmatprep.subr.mxu0 0.0
          %1188 = vmatpush1.msra.mxu0 0.0
          %1189 = vmatprep.subr.mxu0 0.0
          %1190 = vmatpush1.msra.mxu0 0.0
          %1191 = vmatprep.subr.mxu0 0.0
          %1192 = vmatpush1.msra.mxu0 0.0
          %1193 = vmatprep.subr.mxu0 0.0
          %1194 = vmatpush1.msra.mxu0 0.0
          %1195 = vmatprep.mubr.f32.mxu0 0.0
          %1196 = vmatmul.mubr.f32.gmra.mrb[0].mxu0 %v1129
          %v1197 = vpop.f32.mrb[0].mxu0
          %v1198 = vadd.f32 %v1127, %v1197
          %v1199 = vpop.f32.mrb[0].mxu0
          %1200 = vdwg.mxu0
          %vm1201 = vcmask 15360
          %1202 = vst.msk [vmem:[%s5] sm:$0xff] %vm1201, %v1198
        $region52: #{tpu_custom_call.1} parent=39 // pred_fallthru
          _
        // Predicated region
        $region53: #{tpu_custom_call.1} parent=39 // pred_check
          %p1203 = pneg %p142
        $region54: #{tpu_custom_call.1} parent=39 // pred_check_branch
          %1205 = sbr.rel (%p1203) target = $region56
        $region55: #{tpu_custom_call.1} parent=39 // pred_region
          _
        $region56: #{tpu_custom_call.1} parent=39 // pred_fallthru
          _
        // Predicated region
        $region57: #{tpu_custom_call.1} parent=39 // pred_check
          %p1206 = pneg %p142
        $region58: #{tpu_custom_call.1} parent=39 // pred_check_branch
          %1208 = sbr.rel (%p1206) target = $region60
        $region59: #{tpu_custom_call.1} parent=39 // pred_region
          _
        $region60: #{tpu_custom_call.1} parent=39 // pred_fallthru
          _
      $region40: #{tpu_custom_call.1} parent=5 // pred_fallthru
        _
      %p1209 = scmp.le.s32.totalorder 2, %s14
      // Predicated region
      $region61: #{tpu_custom_call.1} parent=5 // pred_check
        %p1210 = pneg %p1209
      $region62: #{tpu_custom_call.1} parent=5 // pred_check_branch
        %1212 = sbr.rel (%p1210) target = $region64
      $region63: #{tpu_custom_call.1} parent=5 // pred_region
        %s1213 = ssub.s32 %s14, 2
      $region64: #{tpu_custom_call.1} parent=5 // pred_fallthru
        _
    $region6: #{tpu_custom_call.1} parent=1 // loop_footer
      %s18 = sadd.s32 1, %s14
    $region7: #{tpu_custom_call.1} parent=1 // loop_footer_branch
      %13 = sbr.rel target = $region3
    $region8: #{tpu_custom_call.1} parent=1 // loop_exit
      _
    %1214 = vsyncpa [#allocation4], 1
    %s1215 = scalar_lea.sflag [#allocation4], 1
    %1216 = vsyncpa %s1215, 1

</llo_original>
